<compile_context>
chip_gen: v7x
topology: tpu7x:2x2x1
jax: 0.10.0
libtpu: 0.0.40
codegen_flags: <defaults>
</compile_context>

<pallas_src>
import functools

import jax
import jax.numpy as jnp
from jax import lax
from jax.experimental import pallas as pl
from jax.experimental.pallas import tpu as pltpu

EPS = 1e-5


# --------------------------------------------------------------------------- #
# Hardware-aware knobs
# --------------------------------------------------------------------------- #
@functools.cache
def _vmem_limit_bytes():
    cap = 128 * 1024 * 1024
    try:
        cap = getattr(pltpu.get_tpu_info(), "vmem_capacity_bytes", cap)
    except Exception:
        pass
    # ~3/4 of physical, capped at 100 MiB: ~96 MiB on v5e/v6e, ~48 MiB on v7x.
    return int(min(cap * 3 // 4, 100 * 1024 * 1024))


def _pick_block_n(n, per_item_bytes, target_bytes):
    """Largest divisor of n with block <= target and >=2 grid steps (if n>=2)."""
    best = 1
    for d in range(1, n + 1):
        if n % d == 0 and d * per_item_bytes <= target_bytes and (n // d >= 2 or n == 1):
            best = d
    return best


# --------------------------------------------------------------------------- #
# Kernels
# --------------------------------------------------------------------------- #
def _conv_stats_kernel(x_ref, scale_ref, shift_ref, w_ref, bias_ref, gmat_ref,
                       y_ref, stats_ref, *, fuse_bn_relu, mxu_dtype):
    """(optional BN+ReLU) -> 3x3 conv (stride 1, pad 1) -> fused channel stats.

    Per grid step (lane dim L = P*W*C, channel fastest, P image rows folded):
      x_ref:     (B, Hs, L)     B images x Hs folded row-groups
      scale_ref: (1, L)         BN scale of the previous layer (iff fuse_bn_relu)
      shift_ref: (1, L)         BN shift of the previous layer (iff fuse_bn_relu)
      w_ref:     (3*L, L)       K-stacked super-banded conv weights (mxu dtype)
      bias_ref:  (1, L)         conv bias tiled over lanes (f32)
      gmat_ref:  (L, C)         lane -> channel group-sum matrix (f32)
      y_ref:     (B, Hs, L)     conv output
      stats_ref: (1, 2, C)      per-block [sum, sum_of_squares] per channel
    """
    B, Hs, L = x_ref.shape
    M = B * Hs

    x = x_ref[...].astype(jnp.float32).reshape(M, L)
    if fuse_bn_relu:
        # Previous layer's BN folded into precomputed scale/shift + ReLU, fused
        # here so the intermediate never takes an extra HBM pass.
        x = jnp.maximum(x * scale_ref[...] + shift_ref[...], 0.0)

    # Vertical neighbours: shift the row (sublane) axis by +-1 and zero the
    # per-image boundary rows.  This provides the conv's vertical zero padding
    # and keeps images stacked in the same block from mixing.
    zrow = jnp.zeros((1, L), jnp.float32)
    x_up = jnp.concatenate([zrow, x[:-1, :]], axis=0)   # row group s-1
    x_dn = jnp.concatenate([x[1:, :], zrow], axis=0)    # row group s+1
    rows = lax.broadcasted_iota(jnp.int32, (M, 1), 0)
    x_up = jnp.where(rows % Hs == 0, 0.0, x_up)
    x_dn = jnp.where(rows % Hs == Hs - 1, 0.0, x_dn)

    # Single K-stacked MXU matmul: K = 3*L covers the vertical taps; horizontal
    # taps, input channels and W zero-padding live in the banded weights.
    xcat = jnp.concatenate([x_up, x, x_dn], axis=1).astype(mxu_dtype)   # (M, 3L)
    y = jnp.dot(xcat, w_ref[...], preferred_element_type=jnp.float32)
    y = y + bias_ref[...]                                               # (M, L) f32

    y_ref[...] = y.reshape(B, Hs, L).astype(y_ref.dtype)

    # Fused BN statistics while y is hot: sublane reduce over rows, then one
    # small matmul folds the (P*W) lane groups down to C channels.  [sum,
    # sumsq] are stacked so the epilogue is a single MXU pass.
    col = jnp.concatenate([jnp.sum(y, axis=0, keepdims=True),
                           jnp.sum(y * y, axis=0, keepdims=True)], axis=0)  # (2, L)
    stats_ref[0] = jnp.dot(col, gmat_ref[...], preferred_element_type=jnp.float32)


def _bn_relu_residual_kernel(x_ref, y_ref, scale_ref, shift_ref, o_ref):
    """out = x + relu(y * scale + shift), fully elementwise, lane dense."""
    h = jnp.maximum(y_ref[...].astype(jnp.float32) * scale_ref[...] + shift_ref[...],
                    0.0)
    o_ref[...] = (x_ref[...].astype(jnp.float32) + h).astype(o_ref.dtype)


# --------------------------------------------------------------------------- #
# pallas_call wrappers
# --------------------------------------------------------------------------- #
def _conv_stats_call(x, scale_w, shift_w, band_cat, bias_w, gmat, *,
                     fuse_bn_relu, mxu_dtype, out_dtype, block_n):
    N, Hs, L = x.shape
    C = gmat.shape[1]
    G = N // block_n
    kern = functools.partial(_conv_stats_kernel,
                             fuse_bn_relu=fuse_bn_relu, mxu_dtype=mxu_dtype)

    def full(shape):
        return pl.BlockSpec(shape, lambda n: (0,) * len(shape))

    y, stats = pl.pallas_call(
        kern,
        grid=(G,),
        in_specs=[
            pl.BlockSpec((block_n, Hs, L), lambda n: (n, 0, 0)),   # x / y_prev
            full(scale_w.shape),                                   # bn scale
            full(shift_w.shape),                                   # bn shift
            full(band_cat.shape),                                  # banded weights
            full(bias_w.shape),                                    # conv bias
            full(gmat.shape),                                      # group-sum matrix
        ],
        out_specs=[
            pl.BlockSpec((block_n, Hs, L), lambda n: (n, 0, 0)),
            pl.BlockSpec((1, 2, C), lambda n: (n, 0, 0)),
        ],
        out_shape=[
            jax.ShapeDtypeStruct((N, Hs, L), out_dtype),
            jax.ShapeDtypeStruct((G, 2, C), jnp.float32),
        ],
        compiler_params=pltpu.CompilerParams(
            dimension_semantics=("parallel",),
            vmem_limit_bytes=_vmem_limit_bytes()),
    )(x, scale_w, shift_w, band_cat, bias_w, gmat)
    return y, stats


def _bn_relu_residual_call(x, y, scale_w, shift_w, *, block_n):
    N, Hs, L = x.shape
    G = N // block_n
    blk = pl.BlockSpec((block_n, Hs, L), lambda n: (n, 0, 0))
    vec = pl.BlockSpec((1, L), lambda n: (0, 0))
    return pl.pallas_call(
        _bn_relu_residual_kernel,
        grid=(G,),
        in_specs=[blk, blk, vec, vec],
        out_specs=blk,
        out_shape=jax.ShapeDtypeStruct((N, Hs, L), x.dtype),
        compiler_params=pltpu.CompilerParams(
            dimension_semantics=("parallel",),
            vmem_limit_bytes=_vmem_limit_bytes()),
    )(x, y, scale_w, shift_w)


# --------------------------------------------------------------------------- #
# Host-side helpers (tiny XLA ops, run once per call)
# --------------------------------------------------------------------------- #
def _banded_weights(w_pt, W, P):
    """PyTorch (Cout, Cin, 3, 3) conv weight -> (3*P*W*C, P*W*C) K-stacked bands.

    The three vertical "super taps" (previous / current / next group of P rows)
    are stacked along K.  Within a tap, block (pi, po) holds the horizontal
    band for vertical offset ky = ds*P + pi - po + 1 (zero if ky outside 0..2),
    and each horizontal band folds the dx taps, Cin and the W zero-padding.
    """
    C = w_pt.shape[0]
    WC = W * C
    wk = jnp.transpose(w_pt, (2, 3, 1, 0)).astype(jnp.float32)   # (ky, dx, Ci, Co)
    hb = []
    for ky in range(3):
        b = jnp.zeros((WC, WC), jnp.float32)
        for dx in range(3):
            b = b + jnp.kron(jnp.eye(W, k=1 - dx, dtype=jnp.float32), wk[ky, dx])
        hb.append(b)
    zero = jnp.zeros((WC, WC), jnp.float32)
    bands = []
    for ds in (-1, 0, 1):
        rows = []
        for pi in range(P):
            row = []
            for po in range(P):
                ky = ds * P + pi - po + 1
                row.append(hb[ky] if 0 <= ky <= 2 else zero)
            rows.append(jnp.concatenate(row, axis=1))
        bands.append(jnp.concatenate(rows, axis=0))
    return jnp.concatenate(bands, axis=0)                         # (3*P*WC, P*WC)


def _tile_channels(v, reps):
    """(C,) per-channel vector -> (1, reps*C), channel-fastest lane layout."""
    return jnp.tile(v.astype(jnp.float32), reps).reshape(1, -1)


def _bn_affine(stats, gamma, beta, count):
    """Accumulated [sum, sumsq] -> BN scale/shift (training-mode batch stats)."""
    s = jnp.sum(stats[:, 0, :], axis=0)
    q = jnp.sum(stats[:, 1, :], axis=0)
    mean = s / count
    # NOTE: single-pass E[y^2]-mean^2; fine at these sizes (see review), a
    # shifted/Welford accumulation would be preferable at production scale.
    var = jnp.maximum(q / count - mean * mean, 0.0)
    inv = lax.rsqrt(var + EPS)
    scale = gamma * inv
    shift = beta - mean * scale
    return scale, shift


# --------------------------------------------------------------------------- #
# Public entry point
# --------------------------------------------------------------------------- #
def resblock_pallas(x_nchw, params, *, mxu_dtype=jnp.bfloat16):
    """x_nchw: (N, C, H, W) float32. Returns (N, C, H, W).

    mxu_dtype=jnp.bfloat16 (default): bf16 MXU operands + bf16 intermediates,
    f32 BN statistics / normalization.  mxu_dtype=jnp.float32 matches the f32
    reference to ~1e-4.
    """
    w1, cb1, g1, b1, w2, cb2, g2, b2 = params
    N, C, H, W = x_nchw.shape
    WC = W * C

    # Fold P image rows into the lane dim so the lane width L = P*W*C reaches a
    # full vreg (>=128) -> unmasked loads/stores and full MXU K/N occupancy.
    P = 1
    if WC < 128:
        P = max(1, 128 // WC)
        while P > 1 and H % P != 0:
            P -= 1
    Hs = H // P
    L = P * WC
    reps = P * W

    inter_dtype = jnp.bfloat16 if mxu_dtype == jnp.bfloat16 else jnp.float32

    # NCHW -> (N, Hs, P*W*C), channel fastest inside each folded row group.
    x_flat = jnp.transpose(x_nchw, (0, 2, 3, 1)).astype(jnp.float32)
    x_flat = x_flat.reshape(N, Hs, L)

    band1 = _banded_weights(w1, W, P).astype(mxu_dtype)
    band2 = _banded_weights(w2, W, P).astype(mxu_dtype)
    bias1 = _tile_channels(cb1, reps)
    bias2 = _tile_channels(cb2, reps)
    gmat = jnp.tile(jnp.eye(C, dtype=jnp.float32), (reps, 1))     # (L, C)
    ones_l = jnp.ones((1, L), jnp.float32)
    zeros_l = jnp.zeros((1, L), jnp.float32)
    count = float(N * H * W)

    bn_conv = _pick_block_n(N, Hs * L * 4, 1 << 20)
    bn_elem = _pick_block_n(N, Hs * L * 4, 2 << 20)

    # Pass 1: conv1 (+bias) with fused per-channel sum / sum-of-squares.
    y1, st1 = _conv_stats_call(x_flat, ones_l, zeros_l, band1, bias1, gmat,
                               fuse_bn_relu=False, mxu_dtype=mxu_dtype,
                               out_dtype=inter_dtype, block_n=bn_conv)
    sc1, sh1 = _bn_affine(st1, g1, b1, count)

    # Pass 2: BN1 + ReLU fused into conv2 (+bias), again with fused stats.
    y2, st2 = _conv_stats_call(y1, _tile_channels(sc1, reps),
                               _tile_channels(sh1, reps), band2, bias2, gmat,
                               fuse_bn_relu=True, mxu_dtype=mxu_dtype,
                               out_dtype=inter_dtype, block_n=bn_conv)
    sc2, sh2 = _bn_affine(st2, g2, b2, count)

    # Pass 3: BN2 + ReLU + residual add (elementwise, lane-dense blocks).
    out_flat = _bn_relu_residual_call(x_flat, y2, _tile_channels(sc2, reps),
                                      _tile_channels(sh2, reps), block_n=bn_elem)

    out = out_flat.reshape(N, H, W, C)
    return jnp.transpose(out, (0, 3, 1, 2)).astype(x_nchw.dtype)


# --------------------------------------------------------------------------- #
# Pure-JAX reference (same training-mode BN semantics) + test harness
# --------------------------------------------------------------------------- #
def resblock_ref(x_nchw, params):
    w1, cb1, g1, b1, w2, cb2, g2, b2 = params
    x = jnp.transpose(x_nchw, (0, 2, 3, 1))  # NHWC

    def conv(x, w, cb):
        w_hwio = jnp.transpose(w, (2, 3, 1, 0))
        y = lax.conv_general_dilated(
            x, w_hwio, window_strides=(1, 1), padding=((1, 1), (1, 1)),
            dimension_numbers=("NHWC", "HWIO", "NHWC"))
        return y + cb.reshape(1, 1, 1, -1)

    def bn_relu(y, g, b):
        mean = jnp.mean(y, axis=(0, 1, 2), keepdims=True)
        var = jnp.mean((y - mean) ** 2, axis=(0, 1, 2), keepdims=True)
        yn = (y - mean) * lax.rsqrt(var + EPS)
        yn = yn * g.reshape(1, 1, 1, -1) + b.reshape(1, 1, 1, -1)
        return jnp.maximum(yn, 0.0)

    h = bn_relu(conv(x, w1, cb1), g1, b1)
    h = bn_relu(conv(h, w2, cb2), g2, b2)
    return jnp.transpose(x + h, (0, 3, 1, 2))


def init_params(key, channels):
    ks = jax.random.split(key, 6)
    w1 = 0.1 * jax.random.normal(ks[0], (channels, channels, 3, 3), jnp.float32)
    cb1 = 0.1 * jax.random.normal(ks[1], (channels,), jnp.float32)
    g1 = 1.0 + 0.1 * jax.random.normal(ks[2], (channels,), jnp.float32)
    b1 = 0.1 * jax.random.normal(ks[3], (channels,), jnp.float32)
    w2 = 0.1 * jax.random.normal(ks[4], (channels, channels, 3, 3), jnp.float32)
    cb2 = 0.1 * jax.random.normal(ks[5], (channels,), jnp.float32)
    g2 = jnp.ones((channels,), jnp.float32)
    b2 = jnp.zeros((channels,), jnp.float32)
    return (w1, cb1, g1, b1, w2, cb2, g2, b2)


if __name__ == "__main__":
    key = jax.random.PRNGKey(0)
    kx, kp = jax.random.split(key)

    N, C, H, W = 2, 4, 16, 16
    x = jax.random.normal(kx, (N, C, H, W), jnp.float32)
    params = init_params(kp, C)

    ref = jax.block_until_ready(resblock_ref(x, params))

    # f32 MXU path: matches the reference tightly.
    fwd_f32 = jax.jit(functools.partial(resblock_pallas, mxu_dtype=jnp.float32))
    out_f32 = jax.block_until_ready(fwd_f32(x, params))
    assert out_f32.shape == (N, C, H, W)
    err_f32 = float(jnp.max(jnp.abs(out_f32 - ref)))
    assert err_f32 < 1e-4, f"f32 path max abs err {err_f32}"

    # Default bf16 MXU path: expected small precision loss, loose tolerance.
    fwd_bf16 = jax.jit(resblock_pallas)
    out_bf16 = jax.block_until_ready(fwd_bf16(x, params))
    assert out_bf16.shape == (N, C, H, W)
    err_bf16 = float(jnp.max(jnp.abs(out_bf16 - ref)))
    assert err_bf16 < 8e-2, f"bf16 path max abs err {err_bf16}"

    print("KERNEL_OK")
</pallas_src>

<mosaic_0001>
module attributes {stable_mosaic.version = 11 : i64} {
  func.func @_conv_stats_kernel(%arg0: i32, %arg1: memref<1x8x128xf32, #tpu.memory_space<vmem>>, %arg2: memref<1x128xf32, #tpu.memory_space<vmem>>, %arg3: memref<1x128xf32, #tpu.memory_space<vmem>>, %arg4: memref<384x128xf32, #tpu.memory_space<vmem>>, %arg5: memref<1x128xf32, #tpu.memory_space<vmem>>, %arg6: memref<128x4xf32, #tpu.memory_space<vmem>>, %arg7: memref<1x8x128xf32, #tpu.memory_space<vmem>>, %arg8: memref<1x2x4xf32, #tpu.memory_space<vmem>>) attributes {dimension_semantics = [#tpu.dimension_semantics<parallel>], iteration_bounds = array<i64: 2>, scalar_prefetch = 0 : i64, scratch_operands = 0 : i64, tpu.core_type = #tpu.core_type<tc>, window_params = [{transform_indices = @transform_0, window_bounds = array<i64: 1, 8, 128>}, {pipeline_mode = #tpu.pipeline_mode<synchronous>, transform_indices = @transform_1, window_bounds = array<i64: 1, 128>}, {pipeline_mode = #tpu.pipeline_mode<synchronous>, transform_indices = @transform_2, window_bounds = array<i64: 1, 128>}, {pipeline_mode = #tpu.pipeline_mode<synchronous>, transform_indices = @transform_3, window_bounds = array<i64: 384, 128>}, {pipeline_mode = #tpu.pipeline_mode<synchronous>, transform_indices = @transform_4, window_bounds = array<i64: 1, 128>}, {pipeline_mode = #tpu.pipeline_mode<synchronous>, transform_indices = @transform_5, window_bounds = array<i64: 128, 4>}, {transform_indices = @transform_6, window_bounds = array<i64: 1, 8, 128>}, {transform_indices = @transform_7, window_bounds = array<i64: 1, 2, 4>}]} {
    %c0 = arith.constant 0 : index
    %c0_0 = arith.constant 0 : index
    %c0_1 = arith.constant 0 : index
    %0 = vector.load %arg1[%c0, %c0_0, %c0_1] : memref<1x8x128xf32, #tpu.memory_space<vmem>>, vector<1x8x128xf32>
    %1 = vector.shape_cast %0 : vector<1x8x128xf32> to vector<8x128xf32>
    %cst = arith.constant 0.000000e+00 : f32
    %2 = vector.broadcast %cst : f32 to vector<1x128xf32>
    %3 = vector.extract_strided_slice %1 {offsets = [0, 0], sizes = [7, 128], strides = [1, 1]} : vector<8x128xf32> to vector<7x128xf32>
    %4 = tpu.concatenate %2, %3 in 0 : vector<1x128xf32>, vector<7x128xf32> -> vector<8x128xf32>
    %5 = vector.extract_strided_slice %1 {offsets = [1, 0], sizes = [7, 128], strides = [1, 1]} : vector<8x128xf32> to vector<7x128xf32>
    %6 = tpu.concatenate %5, %2 in 0 : vector<7x128xf32>, vector<1x128xf32> -> vector<8x128xf32>
    %7 = tpu.iota {dimensions = array<i32: 0>} : vector<8x1xi32>
    %c8_i32 = arith.constant 8 : i32
    %c0_i32 = arith.constant 0 : i32
    %8 = arith.cmpi eq, %c8_i32, %c0_i32 : i32
    %c1_i32 = arith.constant 1 : i32
    %9 = arith.select %8, %c1_i32, %c8_i32 : i32
    %10 = vector.broadcast %9 : i32 to vector<8x1xi32>
    %11 = arith.remsi %7, %10 : vector<8x1xi32>
    %c0_i32_2 = arith.constant 0 : i32
    %12 = vector.broadcast %c0_i32_2 : i32 to vector<8x1xi32>
    %13 = arith.cmpi ne, %11, %12 : vector<8x1xi32>
    %c0_i32_3 = arith.constant 0 : i32
    %14 = vector.broadcast %c0_i32_3 : i32 to vector<8x1xi32>
    %15 = arith.cmpi slt, %11, %14 : vector<8x1xi32>
    %c0_i32_4 = arith.constant 0 : i32
    %16 = arith.cmpi slt, %9, %c0_i32_4 : i32
    %17 = vector.broadcast %16 : i1 to vector<8x1xi1>
    %18 = vector.broadcast %17 : vector<8x1xi1> to vector<8x1xi1>
    %19 = arith.xori %15, %18 : vector<8x1xi1>
    %20 = arith.andi %19, %13 : vector<8x1xi1>
    %21 = vector.broadcast %9 : i32 to vector<8x1xi32>
    %22 = arith.addi %11, %21 : vector<8x1xi32>
    %23 = arith.select %20, %22, %11 : vector<8x1xi1>, vector<8x1xi32>
    %c0_i32_5 = arith.constant 0 : i32
    %24 = vector.broadcast %c0_i32_5 : i32 to vector<8x1xi32>
    %25 = arith.cmpi eq, %23, %24 : vector<8x1xi32>
    %cst_6 = arith.constant 0.000000e+00 : f32
    %26 = vector.shape_cast %25 : vector<8x1xi1> to vector<8x1xi1>
    %27 = vector.broadcast %26 : vector<8x1xi1> to vector<8x128xi1>
    %28 = vector.broadcast %cst_6 : f32 to vector<8x128xf32>
    %29 = arith.select %27, %28, %4 : vector<8x128xi1>, vector<8x128xf32>
    %c8_i32_7 = arith.constant 8 : i32
    %c0_i32_8 = arith.constant 0 : i32
    %30 = arith.cmpi eq, %c8_i32_7, %c0_i32_8 : i32
    %c1_i32_9 = arith.constant 1 : i32
    %31 = arith.select %30, %c1_i32_9, %c8_i32_7 : i32
    %32 = vector.broadcast %31 : i32 to vector<8x1xi32>
    %33 = arith.remsi %7, %32 : vector<8x1xi32>
    %c0_i32_10 = arith.constant 0 : i32
    %34 = vector.broadcast %c0_i32_10 : i32 to vector<8x1xi32>
    %35 = arith.cmpi ne, %33, %34 : vector<8x1xi32>
    %c0_i32_11 = arith.constant 0 : i32
    %36 = vector.broadcast %c0_i32_11 : i32 to vector<8x1xi32>
    %37 = arith.cmpi slt, %33, %36 : vector<8x1xi32>
    %c0_i32_12 = arith.constant 0 : i32
    %38 = arith.cmpi slt, %31, %c0_i32_12 : i32
    %39 = vector.broadcast %38 : i1 to vector<8x1xi1>
    %40 = vector.broadcast %39 : vector<8x1xi1> to vector<8x1xi1>
    %41 = arith.xori %37, %40 : vector<8x1xi1>
    %42 = arith.andi %41, %35 : vector<8x1xi1>
    %43 = vector.broadcast %31 : i32 to vector<8x1xi32>
    %44 = arith.addi %33, %43 : vector<8x1xi32>
    %45 = arith.select %42, %44, %33 : vector<8x1xi1>, vector<8x1xi32>
    %c7_i32 = arith.constant 7 : i32
    %46 = vector.broadcast %c7_i32 : i32 to vector<8x1xi32>
    %47 = arith.cmpi eq, %45, %46 : vector<8x1xi32>
    %cst_13 = arith.constant 0.000000e+00 : f32
    %48 = vector.shape_cast %47 : vector<8x1xi1> to vector<8x1xi1>
    %49 = vector.broadcast %48 : vector<8x1xi1> to vector<8x128xi1>
    %50 = vector.broadcast %cst_13 : f32 to vector<8x128xf32>
    %51 = arith.select %49, %50, %6 : vector<8x128xi1>, vector<8x128xf32>
    %52 = tpu.concatenate %29, %1, %51 in 1 : vector<8x128xf32>, vector<8x128xf32>, vector<8x128xf32> -> vector<8x384xf32>
    %c0_14 = arith.constant 0 : index
    %c0_15 = arith.constant 0 : index
    %53 = vector.load %arg4[%c0_14, %c0_15] : memref<384x128xf32, #tpu.memory_space<vmem>>, vector<384x128xf32>
    %cst_16 = arith.constant dense<0.000000e+00> : vector<8x128xf32>
    %54 = tpu.matmul %52, %53, %cst_16 {dimension_numbers = #tpu.dot_dimension_numbers<[1], [0], [0], [1], [0, 0, 1, 1], [], []>} : vector<8x384xf32>, vector<384x128xf32>, vector<8x128xf32> -> vector<8x128xf32>
    %c0_17 = arith.constant 0 : index
    %c0_18 = arith.constant 0 : index
    %55 = vector.load %arg5[%c0_17, %c0_18] : memref<1x128xf32, #tpu.memory_space<vmem>>, vector<1x128xf32>
    %56 = vector.broadcast %55 : vector<1x128xf32> to vector<8x128xf32>
    %57 = arith.addf %54, %56 : vector<8x128xf32>
    %58 = vector.shape_cast %57 : vector<8x128xf32> to vector<1x8x128xf32>
    %c0_19 = arith.constant 0 : index
    %c0_20 = arith.constant 0 : index
    %c0_21 = arith.constant 0 : index
    %59 = vector.load %arg7[%c0_19, %c0_20, %c0_21] : memref<1x8x128xf32, #tpu.memory_space<vmem>>, vector<1x8x128xf32>
    tpu.vector_store %arg7[%c0_19, %c0_20, %c0_21], %58 {strides = array<i32>} : memref<1x8x128xf32, #tpu.memory_space<vmem>>, vector<1x8x128xf32>,
    %cst_22 = arith.constant dense<0.000000e+00> : vector<128xf32>
    %60 = vector.multi_reduction <add>, %57, %cst_22 [0] : vector<8x128xf32> to vector<128xf32>
    %61 = vector.shape_cast %60 : vector<128xf32> to vector<1x128xf32>
    %62 = arith.mulf %57, %57 : vector<8x128xf32>
    %cst_23 = arith.constant dense<0.000000e+00> : vector<128xf32>
    %63 = vector.multi_reduction <add>, %62, %cst_23 [0] : vector<8x128xf32> to vector<128xf32>
    %64 = vector.shape_cast %63 : vector<128xf32> to vector<1x128xf32>
    %65 = tpu.concatenate %61, %64 in 0 : vector<1x128xf32>, vector<1x128xf32> -> vector<2x128xf32>
    %c0_24 = arith.constant 0 : index
    %c0_25 = arith.constant 0 : index
    %66 = vector.load %arg6[%c0_24, %c0_25] : memref<128x4xf32, #tpu.memory_space<vmem>>, vector<128x4xf32>
    %cst_26 = arith.constant dense<0.000000e+00> : vector<2x4xf32>
    %67 = tpu.matmul %65, %66, %cst_26 {dimension_numbers = #tpu.dot_dimension_numbers<[1], [0], [0], [1], [0, 0, 1, 1], [], []>} : vector<2x128xf32>, vector<128x4xf32>, vector<2x4xf32> -> vector<2x4xf32>
    %c0_27 = arith.constant 0 : index
    %c0_28 = arith.constant 0 : index
    %c0_29 = arith.constant 0 : index
    %68 = vector.load %arg8[%c0_27, %c0_28, %c0_29] : memref<1x2x4xf32, #tpu.memory_space<vmem>>, vector<1x2x4xf32>
    %69 = vector.shape_cast %68 : vector<1x2x4xf32> to vector<2x4xf32>
    %70 = vector.shape_cast %67 : vector<2x4xf32> to vector<1x2x4xf32>
    tpu.vector_store %arg8[%c0_27, %c0_28, %c0_29], %70 {strides = array<i32>} : memref<1x2x4xf32, #tpu.memory_space<vmem>>, vector<1x2x4xf32>,
    return
  }
  func.func @transform_0(%arg0: i32) -> (i32, i32, i32) {
    %c0_i32 = arith.constant 0 : i32
    %c0_i32_0 = arith.constant 0 : i32
    %c0_i32_1 = arith.constant 0 : i32
    return %arg0, %c0_i32, %c0_i32_0 : i32, i32, i32
  }
  func.func @transform_1(%arg0: i32) -> (i32, i32) {
    %c0_i32 = arith.constant 0 : i32
    %c0_i32_0 = arith.constant 0 : i32
    %c0_i32_1 = arith.constant 0 : i32
    return %c0_i32, %c0_i32_0 : i32, i32
  }
  func.func @transform_2(%arg0: i32) -> (i32, i32) {
    %c0_i32 = arith.constant 0 : i32
    %c0_i32_0 = arith.constant 0 : i32
    %c0_i32_1 = arith.constant 0 : i32
    return %c0_i32, %c0_i32_0 : i32, i32
  }
  func.func @transform_3(%arg0: i32) -> (i32, i32) {
    %c0_i32 = arith.constant 0 : i32
    %c0_i32_0 = arith.constant 0 : i32
    %c0_i32_1 = arith.constant 0 : i32
    return %c0_i32, %c0_i32_0 : i32, i32
  }
  func.func @transform_4(%arg0: i32) -> (i32, i32) {
    %c0_i32 = arith.constant 0 : i32
    %c0_i32_0 = arith.constant 0 : i32
    %c0_i32_1 = arith.constant 0 : i32
    return %c0_i32, %c0_i32_0 : i32, i32
  }
  func.func @transform_5(%arg0: i32) -> (i32, i32) {
    %c0_i32 = arith.constant 0 : i32
    %c0_i32_0 = arith.constant 0 : i32
    %c0_i32_1 = arith.constant 0 : i32
    return %c0_i32, %c0_i32_0 : i32, i32
  }
  func.func @transform_6(%arg0: i32) -> (i32, i32, i32) {
    %c0_i32 = arith.constant 0 : i32
    %c0_i32_0 = arith.constant 0 : i32
    %c0_i32_1 = arith.constant 0 : i32
    return %arg0, %c0_i32, %c0_i32_0 : i32, i32, i32
  }
  func.func @transform_7(%arg0: i32) -> (i32, i32, i32) {
    %c0_i32 = arith.constant 0 : i32
    %c0_i32_0 = arith.constant 0 : i32
    %c0_i32_1 = arith.constant 0 : i32
    return %arg0, %c0_i32, %c0_i32_0 : i32, i32, i32
  }
}

module attributes {stable_mosaic.version = 11 : i64} {
  func.func @_conv_stats_kernel(%arg0: i32, %arg1: memref<1x8x128xf32, #tpu.memory_space<vmem>>, %arg2: memref<1x128xf32, #tpu.memory_space<vmem>>, %arg3: memref<1x128xf32, #tpu.memory_space<vmem>>, %arg4: memref<384x128xf32, #tpu.memory_space<vmem>>, %arg5: memref<1x128xf32, #tpu.memory_space<vmem>>, %arg6: memref<128x4xf32, #tpu.memory_space<vmem>>, %arg7: memref<1x8x128xf32, #tpu.memory_space<vmem>>, %arg8: memref<1x2x4xf32, #tpu.memory_space<vmem>>) attributes {dimension_semantics = [#tpu.dimension_semantics<parallel>], iteration_bounds = array<i64: 2>, scalar_prefetch = 0 : i64, scratch_operands = 0 : i64, tpu.core_type = #tpu.core_type<tc>, window_params = [{transform_indices = @transform_0, window_bounds = array<i64: 1, 8, 128>}, {pipeline_mode = #tpu.pipeline_mode<synchronous>, transform_indices = @transform_1, window_bounds = array<i64: 1, 128>}, {pipeline_mode = #tpu.pipeline_mode<synchronous>, transform_indices = @transform_2, window_bounds = array<i64: 1, 128>}, {pipeline_mode = #tpu.pipeline_mode<synchronous>, transform_indices = @transform_3, window_bounds = array<i64: 384, 128>}, {pipeline_mode = #tpu.pipeline_mode<synchronous>, transform_indices = @transform_4, window_bounds = array<i64: 1, 128>}, {pipeline_mode = #tpu.pipeline_mode<synchronous>, transform_indices = @transform_5, window_bounds = array<i64: 128, 4>}, {transform_indices = @transform_6, window_bounds = array<i64: 1, 8, 128>}, {transform_indices = @transform_7, window_bounds = array<i64: 1, 2, 4>}]} {
    %c0 = arith.constant 0 : index
    %c0_0 = arith.constant 0 : index
    %c0_1 = arith.constant 0 : index
    %0 = vector.load %arg1[%c0, %c0_0, %c0_1] : memref<1x8x128xf32, #tpu.memory_space<vmem>>, vector<1x8x128xf32>
    %1 = vector.shape_cast %0 : vector<1x8x128xf32> to vector<8x128xf32>
    %c0_2 = arith.constant 0 : index
    %c0_3 = arith.constant 0 : index
    %2 = vector.load %arg2[%c0_2, %c0_3] : memref<1x128xf32, #tpu.memory_space<vmem>>, vector<1x128xf32>
    %3 = vector.broadcast %2 : vector<1x128xf32> to vector<8x128xf32>
    %4 = arith.mulf %1, %3 : vector<8x128xf32>
    %c0_4 = arith.constant 0 : index
    %c0_5 = arith.constant 0 : index
    %5 = vector.load %arg3[%c0_4, %c0_5] : memref<1x128xf32, #tpu.memory_space<vmem>>, vector<1x128xf32>
    %6 = vector.broadcast %5 : vector<1x128xf32> to vector<8x128xf32>
    %7 = arith.addf %4, %6 : vector<8x128xf32>
    %cst = arith.constant 0.000000e+00 : f32
    %8 = vector.broadcast %cst : f32 to vector<8x128xf32>
    %9 = arith.maximumf %7, %8 : vector<8x128xf32>
    %cst_6 = arith.constant 0.000000e+00 : f32
    %10 = vector.broadcast %cst_6 : f32 to vector<1x128xf32>
    %11 = vector.extract_strided_slice %9 {offsets = [0, 0], sizes = [7, 128], strides = [1, 1]} : vector<8x128xf32> to vector<7x128xf32>
    %12 = tpu.concatenate %10, %11 in 0 : vector<1x128xf32>, vector<7x128xf32> -> vector<8x128xf32>
    %13 = vector.extract_strided_slice %9 {offsets = [1, 0], sizes = [7, 128], strides = [1, 1]} : vector<8x128xf32> to vector<7x128xf32>
    %14 = tpu.concatenate %13, %10 in 0 : vector<7x128xf32>, vector<1x128xf32> -> vector<8x128xf32>
    %15 = tpu.iota {dimensions = array<i32: 0>} : vector<8x1xi32>
    %c8_i32 = arith.constant 8 : i32
    %c0_i32 = arith.constant 0 : i32
    %16 = arith.cmpi eq, %c8_i32, %c0_i32 : i32
    %c1_i32 = arith.constant 1 : i32
    %17 = arith.select %16, %c1_i32, %c8_i32 : i32
    %18 = vector.broadcast %17 : i32 to vector<8x1xi32>
    %19 = arith.remsi %15, %18 : vector<8x1xi32>
    %c0_i32_7 = arith.constant 0 : i32
    %20 = vector.broadcast %c0_i32_7 : i32 to vector<8x1xi32>
    %21 = arith.cmpi ne, %19, %20 : vector<8x1xi32>
    %c0_i32_8 = arith.constant 0 : i32
    %22 = vector.broadcast %c0_i32_8 : i32 to vector<8x1xi32>
    %23 = arith.cmpi slt, %19, %22 : vector<8x1xi32>
    %c0_i32_9 = arith.constant 0 : i32
    %24 = arith.cmpi slt, %17, %c0_i32_9 : i32
    %25 = vector.broadcast %24 : i1 to vector<8x1xi1>
    %26 = vector.broadcast %25 : vector<8x1xi1> to vector<8x1xi1>
    %27 = arith.xori %23, %26 : vector<8x1xi1>
    %28 = arith.andi %27, %21 : vector<8x1xi1>
    %29 = vector.broadcast %17 : i32 to vector<8x1xi32>
    %30 = arith.addi %19, %29 : vector<8x1xi32>
    %31 = arith.select %28, %30, %19 : vector<8x1xi1>, vector<8x1xi32>
    %c0_i32_10 = arith.constant 0 : i32
    %32 = vector.broadcast %c0_i32_10 : i32 to vector<8x1xi32>
    %33 = arith.cmpi eq, %31, %32 : vector<8x1xi32>
    %cst_11 = arith.constant 0.000000e+00 : f32
    %34 = vector.shape_cast %33 : vector<8x1xi1> to vector<8x1xi1>
    %35 = vector.broadcast %34 : vector<8x1xi1> to vector<8x128xi1>
    %36 = vector.broadcast %cst_11 : f32 to vector<8x128xf32>
    %37 = arith.select %35, %36, %12 : vector<8x128xi1>, vector<8x128xf32>
    %c8_i32_12 = arith.constant 8 : i32
    %c0_i32_13 = arith.constant 0 : i32
    %38 = arith.cmpi eq, %c8_i32_12, %c0_i32_13 : i32
    %c1_i32_14 = arith.constant 1 : i32
    %39 = arith.select %38, %c1_i32_14, %c8_i32_12 : i32
    %40 = vector.broadcast %39 : i32 to vector<8x1xi32>
    %41 = arith.remsi %15, %40 : vector<8x1xi32>
    %c0_i32_15 = arith.constant 0 : i32
    %42 = vector.broadcast %c0_i32_15 : i32 to vector<8x1xi32>
    %43 = arith.cmpi ne, %41, %42 : vector<8x1xi32>
    %c0_i32_16 = arith.constant 0 : i32
    %44 = vector.broadcast %c0_i32_16 : i32 to vector<8x1xi32>
    %45 = arith.cmpi slt, %41, %44 : vector<8x1xi32>
    %c0_i32_17 = arith.constant 0 : i32
    %46 = arith.cmpi slt, %39, %c0_i32_17 : i32
    %47 = vector.broadcast %46 : i1 to vector<8x1xi1>
    %48 = vector.broadcast %47 : vector<8x1xi1> to vector<8x1xi1>
    %49 = arith.xori %45, %48 : vector<8x1xi1>
    %50 = arith.andi %49, %43 : vector<8x1xi1>
    %51 = vector.broadcast %39 : i32 to vector<8x1xi32>
    %52 = arith.addi %41, %51 : vector<8x1xi32>
    %53 = arith.select %50, %52, %41 : vector<8x1xi1>, vector<8x1xi32>
    %c7_i32 = arith.constant 7 : i32
    %54 = vector.broadcast %c7_i32 : i32 to vector<8x1xi32>
    %55 = arith.cmpi eq, %53, %54 : vector<8x1xi32>
    %cst_18 = arith.constant 0.000000e+00 : f32
    %56 = vector.shape_cast %55 : vector<8x1xi1> to vector<8x1xi1>
    %57 = vector.broadcast %56 : vector<8x1xi1> to vector<8x128xi1>
    %58 = vector.broadcast %cst_18 : f32 to vector<8x128xf32>
    %59 = arith.select %57, %58, %14 : vector<8x128xi1>, vector<8x128xf32>
    %60 = tpu.concatenate %37, %9, %59 in 1 : vector<8x128xf32>, vector<8x128xf32>, vector<8x128xf32> -> vector<8x384xf32>
    %c0_19 = arith.constant 0 : index
    %c0_20 = arith.constant 0 : index
    %61 = vector.load %arg4[%c0_19, %c0_20] : memref<384x128xf32, #tpu.memory_space<vmem>>, vector<384x128xf32>
    %cst_21 = arith.constant dense<0.000000e+00> : vector<8x128xf32>
    %62 = tpu.matmul %60, %61, %cst_21 {dimension_numbers = #tpu.dot_dimension_numbers<[1], [0], [0], [1], [0, 0, 1, 1], [], []>} : vector<8x384xf32>, vector<384x128xf32>, vector<8x128xf32> -> vector<8x128xf32>
    %c0_22 = arith.constant 0 : index
    %c0_23 = arith.constant 0 : index
    %63 = vector.load %arg5[%c0_22, %c0_23] : memref<1x128xf32, #tpu.memory_space<vmem>>, vector<1x128xf32>
    %64 = vector.broadcast %63 : vector<1x128xf32> to vector<8x128xf32>
    %65 = arith.addf %62, %64 : vector<8x128xf32>
    %66 = vector.shape_cast %65 : vector<8x128xf32> to vector<1x8x128xf32>
    %c0_24 = arith.constant 0 : index
    %c0_25 = arith.constant 0 : index
    %c0_26 = arith.constant 0 : index
    %67 = vector.load %arg7[%c0_24, %c0_25, %c0_26] : memref<1x8x128xf32, #tpu.memory_space<vmem>>, vector<1x8x128xf32>
    tpu.vector_store %arg7[%c0_24, %c0_25, %c0_26], %66 {strides = array<i32>} : memref<1x8x128xf32, #tpu.memory_space<vmem>>, vector<1x8x128xf32>,
    %cst_27 = arith.constant dense<0.000000e+00> : vector<128xf32>
    %68 = vector.multi_reduction <add>, %65, %cst_27 [0] : vector<8x128xf32> to vector<128xf32>
    %69 = vector.shape_cast %68 : vector<128xf32> to vector<1x128xf32>
    %70 = arith.mulf %65, %65 : vector<8x128xf32>
    %cst_28 = arith.constant dense<0.000000e+00> : vector<128xf32>
    %71 = vector.multi_reduction <add>, %70, %cst_28 [0] : vector<8x128xf32> to vector<128xf32>
    %72 = vector.shape_cast %71 : vector<128xf32> to vector<1x128xf32>
    %73 = tpu.concatenate %69, %72 in 0 : vector<1x128xf32>, vector<1x128xf32> -> vector<2x128xf32>
    %c0_29 = arith.constant 0 : index
    %c0_30 = arith.constant 0 : index
    %74 = vector.load %arg6[%c0_29, %c0_30] : memref<128x4xf32, #tpu.memory_space<vmem>>, vector<128x4xf32>
    %cst_31 = arith.constant dense<0.000000e+00> : vector<2x4xf32>
    %75 = tpu.matmul %73, %74, %cst_31 {dimension_numbers = #tpu.dot_dimension_numbers<[1], [0], [0], [1], [0, 0, 1, 1], [], []>} : vector<2x128xf32>, vector<128x4xf32>, vector<2x4xf32> -> vector<2x4xf32>
    %c0_32 = arith.constant 0 : index
    %c0_33 = arith.constant 0 : index
    %c0_34 = arith.constant 0 : index
    %76 = vector.load %arg8[%c0_32, %c0_33, %c0_34] : memref<1x2x4xf32, #tpu.memory_space<vmem>>, vector<1x2x4xf32>
    %77 = vector.shape_cast %76 : vector<1x2x4xf32> to vector<2x4xf32>
    %78 = vector.shape_cast %75 : vector<2x4xf32> to vector<1x2x4xf32>
    tpu.vector_store %arg8[%c0_32, %c0_33, %c0_34], %78 {strides = array<i32>} : memref<1x2x4xf32, #tpu.memory_space<vmem>>, vector<1x2x4xf32>,
    return
  }
  func.func @transform_0(%arg0: i32) -> (i32, i32, i32) {
    %c0_i32 = arith.constant 0 : i32
    %c0_i32_0 = arith.constant 0 : i32
    %c0_i32_1 = arith.constant 0 : i32
    return %arg0, %c0_i32, %c0_i32_0 : i32, i32, i32
  }
  func.func @transform_1(%arg0: i32) -> (i32, i32) {
    %c0_i32 = arith.constant 0 : i32
    %c0_i32_0 = arith.constant 0 : i32
    %c0_i32_1 = arith.constant 0 : i32
    return %c0_i32, %c0_i32_0 : i32, i32
  }
  func.func @transform_2(%arg0: i32) -> (i32, i32) {
    %c0_i32 = arith.constant 0 : i32
    %c0_i32_0 = arith.constant 0 : i32
    %c0_i32_1 = arith.constant 0 : i32
    return %c0_i32, %c0_i32_0 : i32, i32
  }
  func.func @transform_3(%arg0: i32) -> (i32, i32) {
    %c0_i32 = arith.constant 0 : i32
    %c0_i32_0 = arith.constant 0 : i32
    %c0_i32_1 = arith.constant 0 : i32
    return %c0_i32, %c0_i32_0 : i32, i32
  }
  func.func @transform_4(%arg0: i32) -> (i32, i32) {
    %c0_i32 = arith.constant 0 : i32
    %c0_i32_0 = arith.constant 0 : i32
    %c0_i32_1 = arith.constant 0 : i32
    return %c0_i32, %c0_i32_0 : i32, i32
  }
  func.func @transform_5(%arg0: i32) -> (i32, i32) {
    %c0_i32 = arith.constant 0 : i32
    %c0_i32_0 = arith.constant 0 : i32
    %c0_i32_1 = arith.constant 0 : i32
    return %c0_i32, %c0_i32_0 : i32, i32
  }
  func.func @transform_6(%arg0: i32) -> (i32, i32, i32) {
    %c0_i32 = arith.constant 0 : i32
    %c0_i32_0 = arith.constant 0 : i32
    %c0_i32_1 = arith.constant 0 : i32
    return %arg0, %c0_i32, %c0_i32_0 : i32, i32, i32
  }
  func.func @transform_7(%arg0: i32) -> (i32, i32, i32) {
    %c0_i32 = arith.constant 0 : i32
    %c0_i32_0 = arith.constant 0 : i32
    %c0_i32_1 = arith.constant 0 : i32
    return %arg0, %c0_i32, %c0_i32_0 : i32, i32, i32
  }
}

module attributes {stable_mosaic.version = 11 : i64} {
  func.func @_bn_relu_residual_kernel(%arg0: i32, %arg1: memref<1x8x128xf32, #tpu.memory_space<vmem>>, %arg2: memref<1x8x128xf32, #tpu.memory_space<vmem>>, %arg3: memref<1x128xf32, #tpu.memory_space<vmem>>, %arg4: memref<1x128xf32, #tpu.memory_space<vmem>>, %arg5: memref<1x8x128xf32, #tpu.memory_space<vmem>>) attributes {dimension_semantics = [#tpu.dimension_semantics<parallel>], iteration_bounds = array<i64: 2>, scalar_prefetch = 0 : i64, scratch_operands = 0 : i64, tpu.core_type = #tpu.core_type<tc>, window_params = [{transform_indices = @transform_0, window_bounds = array<i64: 1, 8, 128>}, {transform_indices = @transform_1, window_bounds = array<i64: 1, 8, 128>}, {pipeline_mode = #tpu.pipeline_mode<synchronous>, transform_indices = @transform_2, window_bounds = array<i64: 1, 128>}, {pipeline_mode = #tpu.pipeline_mode<synchronous>, transform_indices = @transform_3, window_bounds = array<i64: 1, 128>}, {transform_indices = @transform_4, window_bounds = array<i64: 1, 8, 128>}]} {
    %c0 = arith.constant 0 : index
    %c0_0 = arith.constant 0 : index
    %c0_1 = arith.constant 0 : index
    %0 = vector.load %arg2[%c0, %c0_0, %c0_1] : memref<1x8x128xf32, #tpu.memory_space<vmem>>, vector<1x8x128xf32>
    %c0_2 = arith.constant 0 : index
    %c0_3 = arith.constant 0 : index
    %1 = vector.load %arg3[%c0_2, %c0_3] : memref<1x128xf32, #tpu.memory_space<vmem>>, vector<1x128xf32>
    %2 = vector.shape_cast %1 : vector<1x128xf32> to vector<1x1x128xf32>
    %3 = vector.broadcast %2 : vector<1x1x128xf32> to vector<1x8x128xf32>
    %4 = arith.mulf %0, %3 : vector<1x8x128xf32>
    %c0_4 = arith.constant 0 : index
    %c0_5 = arith.constant 0 : index
    %5 = vector.load %arg4[%c0_4, %c0_5] : memref<1x128xf32, #tpu.memory_space<vmem>>, vector<1x128xf32>
    %6 = vector.shape_cast %5 : vector<1x128xf32> to vector<1x1x128xf32>
    %7 = vector.broadcast %6 : vector<1x1x128xf32> to vector<1x8x128xf32>
    %8 = arith.addf %4, %7 : vector<1x8x128xf32>
    %cst = arith.constant 0.000000e+00 : f32
    %9 = vector.broadcast %cst : f32 to vector<1x8x128xf32>
    %10 = arith.maximumf %8, %9 : vector<1x8x128xf32>
    %c0_6 = arith.constant 0 : index
    %c0_7 = arith.constant 0 : index
    %c0_8 = arith.constant 0 : index
    %11 = vector.load %arg1[%c0_6, %c0_7, %c0_8] : memref<1x8x128xf32, #tpu.memory_space<vmem>>, vector<1x8x128xf32>
    %12 = arith.addf %11, %10 : vector<1x8x128xf32>
    %c0_9 = arith.constant 0 : index
    %c0_10 = arith.constant 0 : index
    %c0_11 = arith.constant 0 : index
    %13 = vector.load %arg5[%c0_9, %c0_10, %c0_11] : memref<1x8x128xf32, #tpu.memory_space<vmem>>, vector<1x8x128xf32>
    tpu.vector_store %arg5[%c0_9, %c0_10, %c0_11], %12 {strides = array<i32>} : memref<1x8x128xf32, #tpu.memory_space<vmem>>, vector<1x8x128xf32>,
    return
  }
  func.func @transform_0(%arg0: i32) -> (i32, i32, i32) {
    %c0_i32 = arith.constant 0 : i32
    %c0_i32_0 = arith.constant 0 : i32
    %c0_i32_1 = arith.constant 0 : i32
    return %arg0, %c0_i32, %c0_i32_0 : i32, i32, i32
  }
  func.func @transform_1(%arg0: i32) -> (i32, i32, i32) {
    %c0_i32 = arith.constant 0 : i32
    %c0_i32_0 = arith.constant 0 : i32
    %c0_i32_1 = arith.constant 0 : i32
    return %arg0, %c0_i32, %c0_i32_0 : i32, i32, i32
  }
  func.func @transform_2(%arg0: i32) -> (i32, i32) {
    %c0_i32 = arith.constant 0 : i32
    %c0_i32_0 = arith.constant 0 : i32
    %c0_i32_1 = arith.constant 0 : i32
    return %c0_i32, %c0_i32_0 : i32, i32
  }
  func.func @transform_3(%arg0: i32) -> (i32, i32) {
    %c0_i32 = arith.constant 0 : i32
    %c0_i32_0 = arith.constant 0 : i32
    %c0_i32_1 = arith.constant 0 : i32
    return %c0_i32, %c0_i32_0 : i32, i32
  }
  func.func @transform_4(%arg0: i32) -> (i32, i32, i32) {
    %c0_i32 = arith.constant 0 : i32
    %c0_i32_0 = arith.constant 0 : i32
    %c0_i32_1 = arith.constant 0 : i32
    return %arg0, %c0_i32, %c0_i32_0 : i32, i32, i32
  }
}

</mosaic_0001>

<llo_original>
// kernel: tile.38
$region0: #{tile.38}
  #allocation0 [shape = 's32[1]{0}', space=sflag, size = 0x4, scoped, tag = 'scoped memory for tile.38']
  %s0 = inlined_call_operand.vmem [shape: f32[4], index: 0, kind: input, shape index: {}]
  %s1 = inlined_call_operand.vmem [shape: f32[32,4], index: 1, kind: output, shape index: {}]
  // Predicated region
  $region2: #{tile.38} parent=0 // pred_check
    _
  $region3: #{tile.38} parent=0 // pred_check_branch
    %3 = sbr.rel (0) target = $region5
  $region4: #{tile.38} parent=0 // pred_region
    _
  $region5: #{tile.38} parent=0 // pred_fallthru
    _
  %v4 = vld [vmem:[%s0] ss:$0 sm:$0xff]
  %5 = vst [vmem:[%s1] sm:$0xff] %v4
  %s6 = scalar_lea.vmem %s1, 8
  %7 = vst [vmem:[%s6] sm:$0xff] %v4
  %s8 = scalar_lea.vmem %s1, 16
  %9 = vst [vmem:[%s8] sm:$0xff] %v4
  %s10 = scalar_lea.vmem %s1, 24
  %11 = vst [vmem:[%s10] sm:$0xff] %v4

// kernel: tile.39
$region0: #{tile.39}
  %s0 = inlined_call_operand.vmem [shape: f32[32,4], index: 0, kind: input, shape index: {}]
  %s1 = inlined_call_operand.hbm [shape: f32[1,128], index: 1, kind: output, shape index: {}]
  $region1: #{tile.39} parent=0
    #allocation0 [shape = 'u8[512]{0}', space=vmem, size = 0x400, scoped, tag = 'operand span for operand 1']
    #allocation1 [shape = 's32[1]{0}', space=sflag, size = 0x4, scoped, tag = 'scoped memory for tile.39']
    #allocation2 [shape = 'u8[4096]{0}', space=vmem, size = 0x1000, scoped, tag = 'scoped mem for output reshape']
    %2 = vsyncpa [#allocation1], 0
    %v3 = vld [vmem:[%s0] sm:$0x1]
    %vm4 = vcmask 31744
    %5 = vst.msk [vmem:[#allocation2] sm:$0x1] %vm4, %v3
    %s6 = scalar_lea.vmem %s0, 31
    %v7 = vld [vmem:[%s6] sm:$0x1]
    %8 = vrot.lane.b32.xlu0 %v7, 124
    %v9 = vpop.permute.xlu0 %8
    %vm10 = vcmask 1048544
    %11 = vst.msk [vmem:[#allocation2] sm:$0x1] %vm10, %v9
    %s12 = scalar_lea.vmem %s0, 30
    %v13 = vld [vmem:[%s12] sm:$0x1]
    %14 = vrot.lane.b32.xlu0 %v13, 120
    %v15 = vpop.permute.xlu0 %14
    %vm16 = vcmask 1015744
    %17 = vst.msk [vmem:[#allocation2] sm:$0x1] %vm16, %v15
    %s18 = scalar_lea.vmem %s0, 29
    %v19 = vld [vmem:[%s18] sm:$0x1]
    %20 = vrot.lane.b32.xlu0 %v19, 116
    %v21 = vpop.permute.xlu0 %20
    %vm22 = vcmask 982944
    %23 = vst.msk [vmem:[#allocation2] sm:$0x1] %vm22, %v21
    %s24 = scalar_lea.vmem %s0, 28
    %v25 = vld [vmem:[%s24] sm:$0x1]
    %26 = vrot.lane.b32.xlu0 %v25, 112
    %v27 = vpop.permute.xlu0 %26
    %vm28 = vcmask 950144
    %29 = vst.msk [vmem:[#allocation2] sm:$0x1] %vm28, %v27
    %s30 = scalar_lea.vmem %s0, 27
    %v31 = vld [vmem:[%s30] sm:$0x1]
    %32 = vrot.lane.b32.xlu0 %v31, 108
    %v33 = vpop.permute.xlu0 %32
    %vm34 = vcmask 917344
    %35 = vst.msk [vmem:[#allocation2] sm:$0x1] %vm34, %v33
    %s36 = scalar_lea.vmem %s0, 26
    %v37 = vld [vmem:[%s36] sm:$0x1]
    %38 = vrot.lane.b32.xlu0 %v37, 104
    %v39 = vpop.permute.xlu0 %38
    %vm40 = vcmask 884544
    %41 = vst.msk [vmem:[#allocation2] sm:$0x1] %vm40, %v39
    %s42 = scalar_lea.vmem %s0, 25
    %v43 = vld [vmem:[%s42] sm:$0x1]
    %44 = vrot.lane.b32.xlu0 %v43, 100
    %v45 = vpop.permute.xlu0 %44
    %vm46 = vcmask 851744
    %47 = vst.msk [vmem:[#allocation2] sm:$0x1] %vm46, %v45
    %s48 = scalar_lea.vmem %s0, 24
    %v49 = vld [vmem:[%s48] sm:$0x1]
    %50 = vrot.lane.b32.xlu0 %v49, 96
    %v51 = vpop.permute.xlu0 %50
    %vm52 = vcmask 818944
    %53 = vst.msk [vmem:[#allocation2] sm:$0x1] %vm52, %v51
    %s54 = scalar_lea.vmem %s0, 23
    %v55 = vld [vmem:[%s54] sm:$0x1]
    %56 = vrot.lane.b32.xlu0 %v55, 92
    %v57 = vpop.permute.xlu0 %56
    %vm58 = vcmask 786144
    %59 = vst.msk [vmem:[#allocation2] sm:$0x1] %vm58, %v57
    %s60 = scalar_lea.vmem %s0, 22
    %v61 = vld [vmem:[%s60] sm:$0x1]
    %62 = vrot.lane.b32.xlu0 %v61, 88
    %v63 = vpop.permute.xlu0 %62
    %vm64 = vcmask 753344
    %65 = vst.msk [vmem:[#allocation2] sm:$0x1] %vm64, %v63
    %s66 = scalar_lea.vmem %s0, 21
    %v67 = vld [vmem:[%s66] sm:$0x1]
    %68 = vrot.lane.b32.xlu0 %v67, 84
    %v69 = vpop.permute.xlu0 %68
    %vm70 = vcmask 720544
    %71 = vst.msk [vmem:[#allocation2] sm:$0x1] %vm70, %v69
    %s72 = scalar_lea.vmem %s0, 20
    %v73 = vld [vmem:[%s72] sm:$0x1]
    %74 = vrot.lane.b32.xlu0 %v73, 80
    %v75 = vpop.permute.xlu0 %74
    %vm76 = vcmask 687744
    %77 = vst.msk [vmem:[#allocation2] sm:$0x1] %vm76, %v75
    %s78 = scalar_lea.vmem %s0, 19
    %v79 = vld [vmem:[%s78] sm:$0x1]
    %80 = vrot.lane.b32.xlu0 %v79, 76
    %v81 = vpop.permute.xlu0 %80
    %vm82 = vcmask 654944
    %83 = vst.msk [vmem:[#allocation2] sm:$0x1] %vm82, %v81
    %s84 = scalar_lea.vmem %s0, 18
    %v85 = vld [vmem:[%s84] sm:$0x1]
    %86 = vrot.lane.b32.xlu0 %v85, 72
    %v87 = vpop.permute.xlu0 %86
    %vm88 = vcmask 622144
    %89 = vst.msk [vmem:[#allocation2] sm:$0x1] %vm88, %v87
    %s90 = scalar_lea.vmem %s0, 17
    %v91 = vld [vmem:[%s90] sm:$0x1]
    %92 = vrot.lane.b32.xlu0 %v91, 68
    %v93 = vpop.permute.xlu0 %92
    %vm94 = vcmask 589344
    %95 = vst.msk [vmem:[#allocation2] sm:$0x1] %vm94, %v93
    %s96 = scalar_lea.vmem %s0, 16
    %v97 = vld [vmem:[%s96] sm:$0x1]
    %98 = vrot.lane.b32.xlu0 %v97, 64
    %v99 = vpop.permute.xlu0 %98
    %vm100 = vcmask 556544
    %101 = vst.msk [vmem:[#allocation2] sm:$0x1] %vm100, %v99
    %s102 = scalar_lea.vmem %s0, 15
    %v103 = vld [vmem:[%s102] sm:$0x1]
    %104 = vrot.lane.b32.xlu0 %v103, 60
    %v105 = vpop.permute.xlu0 %104
    %vm106 = vcmask 523744
    %107 = vst.msk [vmem:[#allocation2] sm:$0x1] %vm106, %v105
    %s108 = scalar_lea.vmem %s0, 14
    %v109 = vld [vmem:[%s108] sm:$0x1]
    %110 = vrot.lane.b32.xlu0 %v109, 56
    %v111 = vpop.permute.xlu0 %110
    %vm112 = vcmask 490944
    %113 = vst.msk [vmem:[#allocation2] sm:$0x1] %vm112, %v111
    %s114 = scalar_lea.vmem %s0, 13
    %v115 = vld [vmem:[%s114] sm:$0x1]
    %116 = vrot.lane.b32.xlu0 %v115, 52
    %v117 = vpop.permute.xlu0 %116
    %vm118 = vcmask 458144
    %119 = vst.msk [vmem:[#allocation2] sm:$0x1] %vm118, %v117
    %s120 = scalar_lea.vmem %s0, 12
    %v121 = vld [vmem:[%s120] sm:$0x1]
    %122 = vrot.lane.b32.xlu0 %v121, 48
    %v123 = vpop.permute.xlu0 %122
    %vm124 = vcmask 425344
    %125 = vst.msk [vmem:[#allocation2] sm:$0x1] %vm124, %v123
    %s126 = scalar_lea.vmem %s0, 11
    %v127 = vld [vmem:[%s126] sm:$0x1]
    %128 = vrot.lane.b32.xlu0 %v127, 44
    %v129 = vpop.permute.xlu0 %128
    %vm130 = vcmask 392544
    %131 = vst.msk [vmem:[#allocation2] sm:$0x1] %vm130, %v129
    %s132 = scalar_lea.vmem %s0, 10
    %v133 = vld [vmem:[%s132] sm:$0x1]
    %134 = vrot.lane.b32.xlu0 %v133, 40
    %v135 = vpop.permute.xlu0 %134
    %vm136 = vcmask 359744
    %137 = vst.msk [vmem:[#allocation2] sm:$0x1] %vm136, %v135
    %s138 = scalar_lea.vmem %s0, 9
    %v139 = vld [vmem:[%s138] sm:$0x1]
    %140 = vrot.lane.b32.xlu0 %v139, 36
    %v141 = vpop.permute.xlu0 %140
    %vm142 = vcmask 326944
    %143 = vst.msk [vmem:[#allocation2] sm:$0x1] %vm142, %v141
    %s144 = scalar_lea.vmem %s0, 8
    %v145 = vld [vmem:[%s144] sm:$0x1]
    %146 = vrot.lane.b32.xlu0 %v145, 32
    %v147 = vpop.permute.xlu0 %146
    %vm148 = vcmask 294144
    %149 = vst.msk [vmem:[#allocation2] sm:$0x1] %vm148, %v147
    %s150 = scalar_lea.vmem %s0, 7
    %v151 = vld [vmem:[%s150] sm:$0x1]
    %152 = vrot.lane.b32.xlu0 %v151, 28
    %v153 = vpop.permute.xlu0 %152
    %vm154 = vcmask 261344
    %155 = vst.msk [vmem:[#allocation2] sm:$0x1] %vm154, %v153
    %s156 = scalar_lea.vmem %s0, 6
    %v157 = vld [vmem:[%s156] sm:$0x1]
    %158 = vrot.lane.b32.xlu0 %v157, 24
    %v159 = vpop.permute.xlu0 %158
    %vm160 = vcmask 228544
    %161 = vst.msk [vmem:[#allocation2] sm:$0x1] %vm160, %v159
    %s162 = scalar_lea.vmem %s0, 5
    %v163 = vld [vmem:[%s162] sm:$0x1]
    %164 = vrot.lane.b32.xlu0 %v163, 20
    %v165 = vpop.permute.xlu0 %164
    %vm166 = vcmask 195744
    %167 = vst.msk [vmem:[#allocation2] sm:$0x1] %vm166, %v165
    %s168 = scalar_lea.vmem %s0, 4
    %v169 = vld [vmem:[%s168] sm:$0x1]
    %170 = vrot.lane.b32.xlu0 %v169, 16
    %v171 = vpop.permute.xlu0 %170
    %vm172 = vcmask 162944
    %173 = vst.msk [vmem:[#allocation2] sm:$0x1] %vm172, %v171
    %s174 = scalar_lea.vmem %s0, 3
    %v175 = vld [vmem:[%s174] sm:$0x1]
    %176 = vrot.lane.b32.xlu0 %v175, 12
    %v177 = vpop.permute.xlu0 %176
    %vm178 = vcmask 130144
    %179 = vst.msk [vmem:[#allocation2] sm:$0x1] %vm178, %v177
    %s180 = scalar_lea.vmem %s0, 2
    %v181 = vld [vmem:[%s180] sm:$0x1]
    %182 = vrot.lane.b32.xlu0 %v181, 8
    %v183 = vpop.permute.xlu0 %182
    %vm184 = vcmask 97344
    %185 = vst.msk [vmem:[#allocation2] sm:$0x1] %vm184, %v183
    %s186 = scalar_lea.vmem %s0, 1
    %v187 = vld [vmem:[%s186] sm:$0x1]
    %188 = vrot.lane.b32.xlu0 %v187, 4
    %v189 = vpop.permute.xlu0 %188
    %vm190 = vcmask 64544
    %191 = vst.msk [vmem:[#allocation2] sm:$0x1] %vm190, %v189
    %s193 = sshllo.u32 0, 1
    %v195 = vld [vmem:[#allocation2] sm:%s193]
    %s196 = sshllo.u32 0, 1
    %197 = vst [vmem:[#allocation0] sm:%s196] %v195
    %s199 = ssub.s32 16, 16
    %200 = vsyncadd [#allocation1], %s199
    %s202 = sshll.u32 [#allocation0], 4
    %s203 = int_to_ptr.vmem [resolvable:$true] %s202
    %205 = dma.vmem_to_hbm [thread:$0]  %s203, 16, %s1, [#allocation1]
    %206 = dma.done [#allocation1], 16
    %207 = vsyncpa [#allocation1], 1

// kernel: resblock_pallas.3
$region0: #{resblock_pallas.3}
  #allocation0 [shape = 'u32[]', space=smem, size = 0x4, offset = 0x4, fixed_abs, tag = 'smem constant byte address 0x4 - core index']
  #allocation1 [shape = 'u32[144,128]{1,0:T(1,128)}', space=vmem, size = 0x12000, scoped, tag = 'internal scratch']
  %s0 = inlined_call_operand.hbm [shape: f32[2,8,128], index: 0, kind: input, shape index: {}]
  %s1 = inlined_call_operand.hbm [shape: f32[1,128], index: 1, kind: input, shape index: {}]
  %s2 = inlined_call_operand.hbm [shape: f32[1,128], index: 2, kind: input, shape index: {}]
  %s3 = inlined_call_operand.hbm [shape: f32[384,128], index: 3, kind: input, shape index: {}]
  %s4 = inlined_call_operand.hbm [shape: f32[1,128], index: 4, kind: input, shape index: {}]
  %s5 = inlined_call_operand.hbm [shape: f32[128,4], index: 5, kind: input, shape index: {}]
  %s6 = inlined_call_operand.hbm [shape: f32[2,8,128], index: 6, kind: output, shape index: {0}]
  %s7 = inlined_call_operand.hbm [shape: f32[2,2,4], index: 7, kind: output, shape index: {1}]
  %8 = xla_tuple %s6, %s7
  %s9 = sld [smem:[#allocation0]]
  $region89: #{resblock_pallas.3} parent=0
    _
  %s11 = ssub.s32 1, %s9
  %s12 = scalar_select 0, %s11, %s9
  $region1: #{resblock_pallas.3} parent=0
    #allocation2 [shape = 'u8[8192]{0}', space=vmem, size = 0x2000, scoped, tag = 'input window, operand 0']
    #allocation3 [shape = 's32[2]{0}', space=sflag, size = 0x8, scoped, tag = 'scoped memory for resblock_pallas.3']
    #allocation4 [shape = 's32[2]{0}', space=sflag, size = 0x8, scoped, tag = 'scoped memory for resblock_pallas.3']
    #allocation5 [shape = 'u8[512]{0}', space=vmem, size = 0x400, scoped, tag = 'input window, operand 1, single buffered']
    #allocation6 [shape = 's32[1]{0}', space=sflag, size = 0x4, scoped, tag = 'scoped memory for resblock_pallas.3']
    #allocation7 [shape = 'u8[512]{0}', space=vmem, size = 0x400, scoped, tag = 'input window, operand 2, single buffered']
    #allocation8 [shape = 'u8[196608]{0}', space=vmem, size = 0x30000, scoped, tag = 'input window, operand 3, single buffered']
    #allocation9 [shape = 's32[1]{0}', space=sflag, size = 0x4, scoped, tag = 'scoped memory for resblock_pallas.3']
    #allocation10 [shape = 'u8[512]{0}', space=vmem, size = 0x400, scoped, tag = 'input window, operand 4, single buffered']
    #allocation11 [shape = 'u8[65536]{0}', space=vmem, size = 0x10000, scoped, tag = 'input window, operand 5, single buffered']
    #allocation12 [shape = 's32[1]{0}', space=sflag, size = 0x4, scoped, tag = 'scoped memory for resblock_pallas.3']
    #allocation13 [shape = 'u8[8192]{0}', space=vmem, size = 0x2000, scoped, tag = 'output window, operand 0']
    #allocation14 [shape = 'u8[2048]{0}', space=vmem, size = 0x800, scoped, tag = 'output window, operand 1']
    #allocation15 [shape = 's32[2]{0}', space=sflag, size = 0x8, scoped, tag = 'scoped memory for resblock_pallas.3']
    %13 = vsyncpa [#allocation3], 0
    %s14 = scalar_lea.sflag [#allocation3], 1
    %15 = vsyncpa %s14, 0
    %16 = vsyncpa [#allocation6], 0
    %17 = vsyncpa [#allocation9], 0
    %18 = vsyncpa [#allocation12], 0
    %19 = vsyncpa [#allocation4], 0
    %s20 = scalar_lea.sflag [#allocation4], 1
    %21 = vsyncpa %s20, 0
    %22 = vsyncpa [#allocation15], 0
    %s23 = scalar_lea.sflag [#allocation15], 1
    %24 = vsyncpa %s23, 0
    loop: start=0, step=1, limit=4
    $region2: #{resblock_pallas.3} parent=1 // loop_pre_header
      _
    $region3: #{resblock_pallas.3} parent=1 // loop_header
      %s26 = sphi 0, %s30
      %p27 = scmp.ge.s32.totalorder %s26, 4
      %s36 = sphi 0, %s38
      %s39 = sphi 0, %s36
      %s40 = sphi 0, %s39
      %s56 = sphi 0, %s40
      %s60 = sphi 0, %s60
      %s62 = sphi 0, %s60
      %s63 = sphi 0, %s62
      %s77 = sphi 0, %s63
      %s81 = sphi 0, %s81
      %s83 = sphi 0, %s81
      %s84 = sphi 0, %s83
      %s98 = sphi 0, %s84
      %s102 = sphi 0, %s102
      %s104 = sphi 0, %s102
      %s105 = sphi 0, %s104
      %s119 = sphi 0, %s105
      %s123 = sphi 0, %s123
      %s125 = sphi 0, %s123
      %s126 = sphi 0, %s125
      %s140 = sphi 0, %s126
      %s144 = sphi 0, %s144
      %s146 = sphi 0, %s144
      %s147 = sphi 0, %s146
      %s161 = sphi 0, %s147
      %s167 = sphi 0, %s169
      %s170 = sphi 0, %s167
      %s171 = sphi 0, %s170
      %s187 = sphi 0, %s171
      %s193 = sphi 0, %s195
      %s196 = sphi 0, %s193
      %s197 = sphi 0, %s196
      %s213 = sphi 0, %s197
    $region4: #{resblock_pallas.3} parent=1 // loop_header_branch
      %29 = sbr.rel (%p27) target = $region8
    $region5: #{resblock_pallas.3} parent=1 // loop_body
      %s31 = ssub.s32 %s26, 1
      %s32 = ssub.s32 %s26, 2
      %s33 = sadd.s32 %s26, 1
      %s34 = ssub.s32 %s26, %s33
      %p35 = scmp.eq.s32.totalorder %s34, 0
      %s37 = sadd.s32 %s36, 1
      %s38 = scalar_select %p35, %s36, %s37
      %p41 = pneg %p35
      %p42 = scmp.eq.s32.totalorder %s26, 1
      %p43 = por %p41, %p42
      %p44 = scmp.ne.s32.totalorder %s36, %s39
      %p45 = scmp.eq.s32.totalorder %s26, 0
      %p46 = por %p44, %p45
      %p47 = scmp.ne.s32.totalorder %s36, %s39
      %p48 = scmp.eq.s32.totalorder %s31, 1
      %p49 = por %p47, %p48
      %p50 = scmp.ne.s32.totalorder %s39, %s40
      %p51 = scmp.eq.s32.totalorder %s31, 0
      %p52 = por %p50, %p51
      %p53 = scmp.ne.s32.totalorder %s39, %s40
      %p54 = scmp.eq.s32.totalorder %s32, 1
      %p55 = por %p53, %p54
      %p57 = scmp.ne.s32.totalorder %s40, %s56
      %p58 = scmp.eq.s32.totalorder %s32, 0
      %p59 = por %p57, %p58
      %s61 = sadd.s32 %s60, 1
      %p64 = scmp.eq.s32.totalorder %s26, 1
      %p65 = scmp.ne.s32.totalorder %s60, %s62
      %p66 = scmp.eq.s32.totalorder %s26, 0
      %p67 = por %p65, %p66
      %p68 = scmp.ne.s32.totalorder %s60, %s62
      %p69 = scmp.eq.s32.totalorder %s31, 1
      %p70 = por %p68, %p69
      %p71 = scmp.ne.s32.totalorder %s62, %s63
      %p72 = scmp.eq.s32.totalorder %s31, 0
      %p73 = por %p71, %p72
      %p74 = scmp.ne.s32.totalorder %s62, %s63
      %p75 = scmp.eq.s32.totalorder %s32, 1
      %p76 = por %p74, %p75
      %p78 = scmp.ne.s32.totalorder %s63, %s77
      %p79 = scmp.eq.s32.totalorder %s32, 0
      %p80 = por %p78, %p79
      %s82 = sadd.s32 %s81, 1
      %p85 = scmp.eq.s32.totalorder %s26, 1
      %p86 = scmp.ne.s32.totalorder %s81, %s83
      %p87 = scmp.eq.s32.totalorder %s26, 0
      %p88 = por %p86, %p87
      %p89 = scmp.ne.s32.totalorder %s81, %s83
      %p90 = scmp.eq.s32.totalorder %s31, 1
      %p91 = por %p89, %p90
      %p92 = scmp.ne.s32.totalorder %s83, %s84
      %p93 = scmp.eq.s32.totalorder %s31, 0
      %p94 = por %p92, %p93
      %p95 = scmp.ne.s32.totalorder %s83, %s84
      %p96 = scmp.eq.s32.totalorder %s32, 1
      %p97 = por %p95, %p96
      %p99 = scmp.ne.s32.totalorder %s84, %s98
      %p100 = scmp.eq.s32.totalorder %s32, 0
      %p101 = por %p99, %p100
      %s103 = sadd.s32 %s102, 1
      %p106 = scmp.eq.s32.totalorder %s26, 1
      %p107 = scmp.ne.s32.totalorder %s102, %s104
      %p108 = scmp.eq.s32.totalorder %s26, 0
      %p109 = por %p107, %p108
      %p110 = scmp.ne.s32.totalorder %s102, %s104
      %p111 = scmp.eq.s32.totalorder %s31, 1
      %p112 = por %p110, %p111
      %p113 = scmp.ne.s32.totalorder %s104, %s105
      %p114 = scmp.eq.s32.totalorder %s31, 0
      %p115 = por %p113, %p114
      %p116 = scmp.ne.s32.totalorder %s104, %s105
      %p117 = scmp.eq.s32.totalorder %s32, 1
      %p118 = por %p116, %p117
      %p120 = scmp.ne.s32.totalorder %s105, %s119
      %p121 = scmp.eq.s32.totalorder %s32, 0
      %p122 = por %p120, %p121
      %s124 = sadd.s32 %s123, 1
      %p127 = scmp.eq.s32.totalorder %s26, 1
      %p128 = scmp.ne.s32.totalorder %s123, %s125
      %p129 = scmp.eq.s32.totalorder %s26, 0
      %p130 = por %p128, %p129
      %p131 = scmp.ne.s32.totalorder %s123, %s125
      %p132 = scmp.eq.s32.totalorder %s31, 1
      %p133 = por %p131, %p132
      %p134 = scmp.ne.s32.totalorder %s125, %s126
      %p135 = scmp.eq.s32.totalorder %s31, 0
      %p136 = por %p134, %p135
      %p137 = scmp.ne.s32.totalorder %s125, %s126
      %p138 = scmp.eq.s32.totalorder %s32, 1
      %p139 = por %p137, %p138
      %p141 = scmp.ne.s32.totalorder %s126, %s140
      %p142 = scmp.eq.s32.totalorder %s32, 0
      %p143 = por %p141, %p142
      %s145 = sadd.s32 %s144, 1
      %p148 = scmp.eq.s32.totalorder %s26, 1
      %p149 = scmp.ne.s32.totalorder %s144, %s146
      %p150 = scmp.eq.s32.totalorder %s26, 0
      %p151 = por %p149, %p150
      %p152 = scmp.ne.s32.totalorder %s144, %s146
      %p153 = scmp.eq.s32.totalorder %s31, 1
      %p154 = por %p152, %p153
      %p155 = scmp.ne.s32.totalorder %s146, %s147
      %p156 = scmp.eq.s32.totalorder %s31, 0
      %p157 = por %p155, %p156
      %p158 = scmp.ne.s32.totalorder %s146, %s147
      %p159 = scmp.eq.s32.totalorder %s32, 1
      %p160 = por %p158, %p159
      %p162 = scmp.ne.s32.totalorder %s147, %s161
      %p163 = scmp.eq.s32.totalorder %s32, 0
      %p164 = por %p162, %p163
      %s165 = ssub.s32 %s26, %s33
      %p166 = scmp.eq.s32.totalorder %s165, 0
      %s168 = sadd.s32 %s167, 1
      %s169 = scalar_select %p166, %s167, %s168
      %p172 = pneg %p166
      %p173 = scmp.eq.s32.totalorder %s26, 1
      %p174 = por %p172, %p173
      %p175 = scmp.ne.s32.totalorder %s167, %s170
      %p176 = scmp.eq.s32.totalorder %s26, 0
      %p177 = por %p175, %p176
      %p178 = scmp.ne.s32.totalorder %s167, %s170
      %p179 = scmp.eq.s32.totalorder %s31, 1
      %p180 = por %p178, %p179
      %p181 = scmp.ne.s32.totalorder %s170, %s171
      %p182 = scmp.eq.s32.totalorder %s31, 0
      %p183 = por %p181, %p182
      %p184 = scmp.ne.s32.totalorder %s170, %s171
      %p185 = scmp.eq.s32.totalorder %s32, 1
      %p186 = por %p184, %p185
      %p188 = scmp.ne.s32.totalorder %s171, %s187
      %p189 = scmp.eq.s32.totalorder %s32, 0
      %p190 = por %p188, %p189
      %s191 = ssub.s32 %s26, %s33
      %p192 = scmp.eq.s32.totalorder %s191, 0
      %s194 = sadd.s32 %s193, 1
      %s195 = scalar_select %p192, %s193, %s194
      %p198 = pneg %p192
      %p199 = scmp.eq.s32.totalorder %s26, 1
      %p200 = por %p198, %p199
      %p201 = scmp.ne.s32.totalorder %s193, %s196
      %p202 = scmp.eq.s32.totalorder %s26, 0
      %p203 = por %p201, %p202
      %p204 = scmp.ne.s32.totalorder %s193, %s196
      %p205 = scmp.eq.s32.totalorder %s31, 1
      %p206 = por %p204, %p205
      %p207 = scmp.ne.s32.totalorder %s196, %s197
      %p208 = scmp.eq.s32.totalorder %s31, 0
      %p209 = por %p207, %p208
      %p210 = scmp.ne.s32.totalorder %s196, %s197
      %p211 = scmp.eq.s32.totalorder %s32, 1
      %p212 = por %p210, %p211
      %p214 = scmp.ne.s32.totalorder %s197, %s213
      %p215 = scmp.eq.s32.totalorder %s32, 0
      %p216 = por %p214, %p215
      %p217 = scmp.le.s32.totalorder 1, %s26
      %p218 = scmp.lt.s32.totalorder %s26, 3
      %p219 = pnand %p217, %p218
      %p220 = pneg %p219
      // Predicated region
      $region9: #{resblock_pallas.3} parent=5 // pred_check
        _
      $region10: #{resblock_pallas.3} parent=5 // pred_check_branch
        %222 = sbr.rel (%p219) target = $region12
      $region11: #{resblock_pallas.3} parent=5 // pred_region
        %s223 = ssub.s32 %s26, 1
        // Predicated region
        $region13: #{resblock_pallas.3} parent=11 // pred_check
          %p224 = pneg %p73
        $region14: #{resblock_pallas.3} parent=11 // pred_check_branch
          %226 = sbr.rel (%p224) target = $region16
        $region15: #{resblock_pallas.3} parent=11 // pred_region
          %s228 = ssub.s32 16, 16
          %229 = vsyncadd [#allocation6], %s228
          %s231 = sshll.u32 [#allocation5], 4
          %s232 = int_to_ptr.vmem [resolvable:$true] %s231
          %234 = dma.hbm_to_vmem [thread:$0]  %s1, 16, %s232, [#allocation6]
        $region16: #{resblock_pallas.3} parent=11 // pred_fallthru
          _
        // Predicated region
        $region17: #{resblock_pallas.3} parent=11 // pred_check
          %p235 = pneg %p94
        $region18: #{resblock_pallas.3} parent=11 // pred_check_branch
          %237 = sbr.rel (%p235) target = $region20
        $region19: #{resblock_pallas.3} parent=11 // pred_region
          %s239 = ssub.s32 16, 16
          %240 = vsyncadd [#allocation6], %s239
          %s242 = sshll.u32 [#allocation7], 4
          %s243 = int_to_ptr.vmem [resolvable:$true] %s242
          %245 = dma.hbm_to_vmem [thread:$0]  %s2, 16, %s243, [#allocation6]
        $region20: #{resblock_pallas.3} parent=11 // pred_fallthru
          _
        // Predicated region
        $region21: #{resblock_pallas.3} parent=11 // pred_check
          %p246 = pneg %p115
        $region22: #{resblock_pallas.3} parent=11 // pred_check_branch
          %248 = sbr.rel (%p246) target = $region24
        $region23: #{resblock_pallas.3} parent=11 // pred_region
          %s250 = ssub.s32 6144, 6144
          %251 = vsyncadd [#allocation9], %s250
          %s252 = sshll.u32 [#allocation8], 4
          %s253 = int_to_ptr.vmem [resolvable:$true] %s252
          %258 = dma.hbm_to_vmem [thread:$0]  %s3, 6144, %s253, [#allocation9], 128, 128, 8
        $region24: #{resblock_pallas.3} parent=11 // pred_fallthru
          _
        // Predicated region
        $region25: #{resblock_pallas.3} parent=11 // pred_check
          %p259 = pneg %p136
        $region26: #{resblock_pallas.3} parent=11 // pred_check_branch
          %261 = sbr.rel (%p259) target = $region28
        $region27: #{resblock_pallas.3} parent=11 // pred_region
          %s263 = ssub.s32 16, 16
          %264 = vsyncadd [#allocation9], %s263
          %s266 = sshll.u32 [#allocation10], 4
          %s267 = int_to_ptr.vmem [resolvable:$true] %s266
          %269 = dma.hbm_to_vmem [thread:$0]  %s4, 16, %s267, [#allocation9]
        $region28: #{resblock_pallas.3} parent=11 // pred_fallthru
          _
        // Predicated region
        $region29: #{resblock_pallas.3} parent=11 // pred_check
          %p270 = pneg %p157
        $region30: #{resblock_pallas.3} parent=11 // pred_check_branch
          %272 = sbr.rel (%p270) target = $region32
        $region31: #{resblock_pallas.3} parent=11 // pred_region
          %s274 = ssub.s32 2048, 2048
          %275 = vsyncadd [#allocation12], %s274
          %s276 = sshll.u32 [#allocation11], 4
          %s277 = int_to_ptr.vmem [resolvable:$true] %s276
          %282 = dma.hbm_to_vmem [thread:$0]  %s5, 2048, %s277, [#allocation12], 128, 128, 8
        $region32: #{resblock_pallas.3} parent=11 // pred_fallthru
          _
      $region12: #{resblock_pallas.3} parent=5 // pred_fallthru
        _
      %p283 = scmp.lt.s32.totalorder %s26, 2
      // Predicated region
      $region33: #{resblock_pallas.3} parent=5 // pred_check
        %p284 = pneg %p283
      $region34: #{resblock_pallas.3} parent=5 // pred_check_branch
        %286 = sbr.rel (%p284) target = $region36
      $region35: #{resblock_pallas.3} parent=5 // pred_region
        // Predicated region
        $region37: #{resblock_pallas.3} parent=35 // pred_check
          %p287 = pneg %p46
        $region38: #{resblock_pallas.3} parent=35 // pred_check_branch
          %289 = sbr.rel (%p287) target = $region40
        $region39: #{resblock_pallas.3} parent=35 // pred_region
          %s290 = sand.u32 %s36, 1
          %s291 = scalar_lea.sflag [#allocation3], %s290
          %s292 = sand.u32 %s36, 1
          %s293 = smul.addr %s292, 8
          %s294 = scalar_lea.vmem [#allocation2], %s293
          %s296 = ssub.s32 128, 128
          %297 = vsyncadd %s291, %s296
          %s298 = smul.addr %s26, 128
          %s299 = scalar_lea.hbm %s0, %s298
          %s301 = sshll.u32 %s294, 4
          %s302 = int_to_ptr.vmem [resolvable:$true] %s301
          %304 = dma.hbm_to_vmem [thread:$0]  %s299, 128, %s302, %s291
        $region40: #{resblock_pallas.3} parent=35 // pred_fallthru
          _
      $region36: #{resblock_pallas.3} parent=5 // pred_fallthru
        _
      %p305 = scmp.le.s32.totalorder 1, %s26
      %p306 = scmp.lt.s32.totalorder %s26, 3
      %p307 = pnand %p305, %p306
      %p308 = pneg %p307
      // Predicated region
      $region41: #{resblock_pallas.3} parent=5 // pred_check
        _
      $region42: #{resblock_pallas.3} parent=5 // pred_check_branch
        %310 = sbr.rel (%p307) target = $region44
      $region43: #{resblock_pallas.3} parent=5 // pred_region
        %s311 = ssub.s32 %s26, 1
        %s312 = sand.u32 %s39, 1
        %s313 = scalar_lea.sflag [#allocation3], %s312
        %s314 = sand.u32 %s39, 1
        %s315 = smul.addr %s314, 8
        %s316 = scalar_lea.vmem [#allocation2], %s315
        // Predicated region
        $region45: #{resblock_pallas.3} parent=43 // pred_check
          %p317 = pneg %p52
        $region46: #{resblock_pallas.3} parent=43 // pred_check_branch
          %319 = sbr.rel (%p317) target = $region48
        $region47: #{resblock_pallas.3} parent=43 // pred_region
          %320 = dma.done %s313, 128
        $region48: #{resblock_pallas.3} parent=43 // pred_fallthru
          _
        // Predicated region
        $region49: #{resblock_pallas.3} parent=43 // pred_check
          %p321 = pneg %p73
        $region50: #{resblock_pallas.3} parent=43 // pred_check_branch
          %323 = sbr.rel (%p321) target = $region52
        $region51: #{resblock_pallas.3} parent=43 // pred_region
          %324 = dma.done [#allocation6], 16
        $region52: #{resblock_pallas.3} parent=43 // pred_fallthru
          _
        // Predicated region
        $region53: #{resblock_pallas.3} parent=43 // pred_check
          %p325 = pneg %p94
        $region54: #{resblock_pallas.3} parent=43 // pred_check_branch
          %327 = sbr.rel (%p325) target = $region56
        $region55: #{resblock_pallas.3} parent=43 // pred_region
          %328 = dma.done [#allocation6], 16
        $region56: #{resblock_pallas.3} parent=43 // pred_fallthru
          _
        // Predicated region
        $region57: #{resblock_pallas.3} parent=43 // pred_check
          %p329 = pneg %p115
        $region58: #{resblock_pallas.3} parent=43 // pred_check_branch
          %331 = sbr.rel (%p329) target = $region60
        $region59: #{resblock_pallas.3} parent=43 // pred_region
          %332 = dma.done [#allocation9], 6144
        $region60: #{resblock_pallas.3} parent=43 // pred_fallthru
          _
        // Predicated region
        $region61: #{resblock_pallas.3} parent=43 // pred_check
          %p333 = pneg %p136
        $region62: #{resblock_pallas.3} parent=43 // pred_check_branch
          %335 = sbr.rel (%p333) target = $region64
        $region63: #{resblock_pallas.3} parent=43 // pred_region
          %336 = dma.done [#allocation9], 16
        $region64: #{resblock_pallas.3} parent=43 // pred_fallthru
          _
        // Predicated region
        $region65: #{resblock_pallas.3} parent=43 // pred_check
          %p337 = pneg %p157
        $region66: #{resblock_pallas.3} parent=43 // pred_check_branch
          %339 = sbr.rel (%p337) target = $region68
        $region67: #{resblock_pallas.3} parent=43 // pred_region
          %340 = dma.done [#allocation12], 2048
        $region68: #{resblock_pallas.3} parent=43 // pred_fallthru
          _
        %s341 = sand.u32 %s39, 1
        %s342 = scalar_lea.sflag [#allocation3], %s341
        %s343 = sand.u32 %s39, 1
        %s344 = smul.addr %s343, 8
        %s345 = scalar_lea.vmem [#allocation2], %s344
        %p346 = pneg %p52
        %p347 = pneg %p49
        %p348 = pneg %p73
        %p349 = pneg %p70
        %p350 = pneg %p94
        %p351 = pneg %p91
        %p352 = pneg %p115
        %p353 = pneg %p112
        %p354 = pneg %p136
        %p355 = pneg %p133
        %p356 = pneg %p157
        %p357 = pneg %p154
        %p358 = pneg %p183
        %p359 = pneg %p180
        %s360 = sand.u32 %s170, 1
        %s361 = scalar_lea.sflag [#allocation4], %s360
        %s362 = sand.u32 %s170, 1
        %s363 = smul.addr %s362, 8
        %s364 = scalar_lea.vmem [#allocation13], %s363
        %p365 = pneg %p209
        %p366 = pneg %p206
        %s367 = sand.u32 %s196, 1
        %s368 = scalar_lea.sflag [#allocation15], %s367
        %s369 = sand.u32 %s196, 1
        %s370 = smul.addr %s369, 2
        %s371 = scalar_lea.vmem [#allocation14], %s370
        %v372 = vld [vmem:[%s316] sm:$0xff]
        %v374 = vrot.slane %v372, 7
        %vm376 = vcmask 1040384
        %v377 = vsel %vm376, 0.0, %v374
        %v378 = vrot.slane %v372, 1
        %vm380 = vcmask 1046528
        %v381 = vsel %vm380, %v378, 0.0
        %v382 = vlaneseq
        %v383 = vshrl.u32 %v382, 7
        %vm384 = vcmp.lt.s32.totalorder %v383, 0
        %v385 = vsub.s32 0, %v383
        %v386 = vsel %vm384, %v385, %v383
        %v387 = vshrl.u32 %v386, 3
        %v388 = vand.u32 %v386, 7
        %v389 = vsub.s32 0, %v388
        %v390 = vsel %vm384, %v389, %v388
        %vm391 = vcmp.ne.s32.totalorder %v390, 0
        %vm392 = vcmp.lt.s32.totalorder %v390, 0
        %vm393 = vmand %vm392, %vm391
        %v394 = vadd.s32 %v390, 8
        %v395 = vsel %vm393, %v394, %v390
        %vm396 = vcmp.eq.s32.totalorder %v395, 0
        %v397 = vsel %vm396, 1, 0
        %vm398 = vcmp.eq.s32.totalorder %v397, 1
        %v399 = vsel %vm398, 0.0, %v377
        %vm400 = vcmp.eq.s32.totalorder %v395, 7
        %v401 = vsel %vm400, 1, 0
        %vm402 = vcmp.eq.s32.totalorder %v401, 1
        %v403 = vsel %vm402, 0.0, %v381
        %v404 = vld [vmem:[#allocation8] sm:$0xff]
        %v405 = vld [vmem:[#allocation8 + $0x8] sm:$0xff]
        %v406 = vld [vmem:[#allocation8 + $0x10] sm:$0xff]
        %v407 = vld [vmem:[#allocation8 + $0x18] sm:$0xff]
        %v408 = vld [vmem:[#allocation8 + $0x20] sm:$0xff]
        %v409 = vld [vmem:[#allocation8 + $0x28] sm:$0xff]
        %v410 = vld [vmem:[#allocation8 + $0x30] sm:$0xff]
        %v411 = vld [vmem:[#allocation8 + $0x38] sm:$0xff]
        %v412 = vld [vmem:[#allocation8 + $0x40] sm:$0xff]
        %v413 = vld [vmem:[#allocation8 + $0x48] sm:$0xff]
        %v414 = vld [vmem:[#allocation8 + $0x50] sm:$0xff]
        %v415 = vld [vmem:[#allocation8 + $0x58] sm:$0xff]
        %v416 = vld [vmem:[#allocation8 + $0x60] sm:$0xff]
        %v417 = vld [vmem:[#allocation8 + $0x68] sm:$0xff]
        %v418 = vld [vmem:[#allocation8 + $0x70] sm:$0xff]
        %v419 = vld [vmem:[#allocation8 + $0x78] sm:$0xff]
        %v420 = vld [vmem:[#allocation8 + $0x80] sm:$0xff]
        %v421 = vld [vmem:[#allocation8 + $0x88] sm:$0xff]
        %v422 = vld [vmem:[#allocation8 + $0x90] sm:$0xff]
        %v423 = vld [vmem:[#allocation8 + $0x98] sm:$0xff]
        %v424 = vld [vmem:[#allocation8 + $0xa0] sm:$0xff]
        %v425 = vld [vmem:[#allocation8 + $0xa8] sm:$0xff]
        %v426 = vld [vmem:[#allocation8 + $0xb0] sm:$0xff]
        %v427 = vld [vmem:[#allocation8 + $0xb8] sm:$0xff]
        %v428 = vld [vmem:[#allocation8 + $0xc0] sm:$0xff]
        %v429 = vld [vmem:[#allocation8 + $0xc8] sm:$0xff]
        %v430 = vld [vmem:[#allocation8 + $0xd0] sm:$0xff]
        %v431 = vld [vmem:[#allocation8 + $0xd8] sm:$0xff]
        %v432 = vld [vmem:[#allocation8 + $0xe0] sm:$0xff]
        %v433 = vld [vmem:[#allocation8 + $0xe8] sm:$0xff]
        %v434 = vld [vmem:[#allocation8 + $0xf0] sm:$0xff]
        %v435 = vld [vmem:[#allocation8 + $0xf8] sm:$0xff]
        %v436 = vld [vmem:[#allocation8 + $0x100] sm:$0xff]
        %v437 = vld [vmem:[#allocation8 + $0x108] sm:$0xff]
        %v438 = vld [vmem:[#allocation8 + $0x110] sm:$0xff]
        %v439 = vld [vmem:[#allocation8 + $0x118] sm:$0xff]
        %v440 = vld [vmem:[#allocation8 + $0x120] sm:$0xff]
        %v441 = vld [vmem:[#allocation8 + $0x128] sm:$0xff]
        %v442 = vld [vmem:[#allocation8 + $0x130] sm:$0xff]
        %v443 = vld [vmem:[#allocation8 + $0x138] sm:$0xff]
        %v444 = vld [vmem:[#allocation8 + $0x140] sm:$0xff]
        %v445 = vld [vmem:[#allocation8 + $0x148] sm:$0xff]
        %v446 = vld [vmem:[#allocation8 + $0x150] sm:$0xff]
        %v447 = vld [vmem:[#allocation8 + $0x158] sm:$0xff]
        %v448 = vld [vmem:[#allocation8 + $0x160] sm:$0xff]
        %v449 = vld [vmem:[#allocation8 + $0x168] sm:$0xff]
        %v450 = vld [vmem:[#allocation8 + $0x170] sm:$0xff]
        %v451 = vld [vmem:[#allocation8 + $0x178] sm:$0xff]
        %v452 = vld [vmem:[#allocation10] sm:$0x1]
        %v454 = vlaneseq
        %v455 = vshrl.u32 %v454, 7
        %v456 = vsub.s32 0, %v455
        %v457 = vrot.slane %v452, %v456
        %459 = vmatprep.subr.mxu0 0.0
        %460 = vmatpush1.msra.mxu0 %v404
        %461 = vmatprep.subr.mxu0 0.0
        %462 = vmatpush1.msra.mxu0 %v405
        %463 = vmatprep.subr.mxu0 0.0
        %464 = vmatpush1.msra.mxu0 %v406
        %465 = vmatprep.subr.mxu0 0.0
        %466 = vmatpush1.msra.mxu0 %v407
        %467 = vmatprep.subr.mxu0 0.0
        %468 = vmatpush1.msra.mxu0 %v408
        %469 = vmatprep.subr.mxu0 0.0
        %470 = vmatpush1.msra.mxu0 %v409
        %471 = vmatprep.subr.mxu0 0.0
        %472 = vmatpush1.msra.mxu0 %v410
        %473 = vmatprep.subr.mxu0 0.0
        %474 = vmatpush1.msra.mxu0 %v411
        %475 = vmatprep.subr.mxu0 0.0
        %476 = vmatpush1.msra.mxu0 %v412
        %477 = vmatprep.subr.mxu0 0.0
        %478 = vmatpush1.msra.mxu0 %v413
        %479 = vmatprep.subr.mxu0 0.0
        %480 = vmatpush1.msra.mxu0 %v414
        %481 = vmatprep.subr.mxu0 0.0
        %482 = vmatpush1.msra.mxu0 %v415
        %483 = vmatprep.subr.mxu0 0.0
        %484 = vmatpush1.msra.mxu0 %v416
        %485 = vmatprep.subr.mxu0 0.0
        %486 = vmatpush1.msra.mxu0 %v417
        %487 = vmatprep.subr.mxu0 0.0
        %488 = vmatpush1.msra.mxu0 %v418
        %489 = vmatprep.subr.mxu0 0.0
        %490 = vmatpush1.msra.mxu0 %v419
        %491 = vmatprep.subr.mxu0 0.0
        %492 = vmatpush1.msra.mxu0 %v420
        %493 = vmatprep.subr.mxu0 0.0
        %494 = vmatpush1.msra.mxu0 %v421
        %495 = vmatprep.subr.mxu0 0.0
        %496 = vmatpush1.msra.mxu0 %v422
        %497 = vmatprep.subr.mxu0 0.0
        %498 = vmatpush1.msra.mxu0 %v423
        %499 = vmatprep.subr.mxu0 0.0
        %500 = vmatpush1.msra.mxu0 %v424
        %501 = vmatprep.subr.mxu0 0.0
        %502 = vmatpush1.msra.mxu0 %v425
        %503 = vmatprep.subr.mxu0 0.0
        %504 = vmatpush1.msra.mxu0 %v426
        %505 = vmatprep.subr.mxu0 0.0
        %506 = vmatpush1.msra.mxu0 %v427
        %507 = vmatprep.subr.mxu0 0.0
        %508 = vmatpush1.msra.mxu0 %v428
        %509 = vmatprep.subr.mxu0 0.0
        %510 = vmatpush1.msra.mxu0 %v429
        %511 = vmatprep.subr.mxu0 0.0
        %512 = vmatpush1.msra.mxu0 %v430
        %513 = vmatprep.subr.mxu0 0.0
        %514 = vmatpush1.msra.mxu0 %v431
        %515 = vmatprep.subr.mxu0 0.0
        %516 = vmatpush1.msra.mxu0 %v432
        %517 = vmatprep.subr.mxu0 0.0
        %518 = vmatpush1.msra.mxu0 %v433
        %519 = vmatprep.subr.mxu0 0.0
        %520 = vmatpush1.msra.mxu0 %v434
        %521 = vmatprep.subr.mxu0 0.0
        %522 = vmatpush1.msra.mxu0 %v435
        %523 = vmatprep.mubr.f32.mxu0 %v372
        %524 = vmatmul.mubr.f32.gmra.mrb[0].mxu0 %v399
        %v525 = vpop.f32.mrb[0].mxu0
        %v526 = vadd.f32 %v457, %v525
        %v527 = vpop.f32.mrb[0].mxu0
        %528 = vdwg.mxu0
        %529 = vmatprep.subr.mxu0 0.0
        %530 = vmatpush1.msra.mxu0 %v436
        %531 = vmatprep.subr.mxu0 0.0
        %532 = vmatpush1.msra.mxu0 %v437
        %533 = vmatprep.subr.mxu0 0.0
        %534 = vmatpush1.msra.mxu0 %v438
        %535 = vmatprep.subr.mxu0 0.0
        %536 = vmatpush1.msra.mxu0 %v439
        %537 = vmatprep.subr.mxu0 0.0
        %538 = vmatpush1.msra.mxu0 %v440
        %539 = vmatprep.subr.mxu0 0.0
        %540 = vmatpush1.msra.mxu0 %v441
        %541 = vmatprep.subr.mxu0 0.0
        %542 = vmatpush1.msra.mxu0 %v442
        %543 = vmatprep.subr.mxu0 0.0
        %544 = vmatpush1.msra.mxu0 %v443
        %545 = vmatprep.subr.mxu0 0.0
        %546 = vmatpush1.msra.mxu0 %v444
        %547 = vmatprep.subr.mxu0 0.0
        %548 = vmatpush1.msra.mxu0 %v445
        %549 = vmatprep.subr.mxu0 0.0
        %550 = vmatpush1.msra.mxu0 %v446
        %551 = vmatprep.subr.mxu0 0.0
        %552 = vmatpush1.msra.mxu0 %v447
        %553 = vmatprep.subr.mxu0 0.0
        %554 = vmatpush1.msra.mxu0 %v448
        %555 = vmatprep.subr.mxu0 0.0
        %556 = vmatpush1.msra.mxu0 %v449
        %557 = vmatprep.subr.mxu0 0.0
        %558 = vmatpush1.msra.mxu0 %v450
        %559 = vmatprep.subr.mxu0 0.0
        %560 = vmatpush1.msra.mxu0 %v451
        %561 = vmatprep.subr.mxu0 0.0
        %562 = vmatpush1.msra.mxu0 0.0
        %563 = vmatprep.subr.mxu0 0.0
        %564 = vmatpush1.msra.mxu0 0.0
        %565 = vmatprep.subr.mxu0 0.0
        %566 = vmatpush1.msra.mxu0 0.0
        %567 = vmatprep.subr.mxu0 0.0
        %568 = vmatpush1.msra.mxu0 0.0
        %569 = vmatprep.subr.mxu0 0.0
        %570 = vmatpush1.msra.mxu0 0.0
        %571 = vmatprep.subr.mxu0 0.0
        %572 = vmatpush1.msra.mxu0 0.0
        %573 = vmatprep.subr.mxu0 0.0
        %574 = vmatpush1.msra.mxu0 0.0
        %575 = vmatprep.subr.mxu0 0.0
        %576 = vmatpush1.msra.mxu0 0.0
        %577 = vmatprep.subr.mxu0 0.0
        %578 = vmatpush1.msra.mxu0 0.0
        %579 = vmatprep.subr.mxu0 0.0
        %580 = vmatpush1.msra.mxu0 0.0
        %581 = vmatprep.subr.mxu0 0.0
        %582 = vmatpush1.msra.mxu0 0.0
        %583 = vmatprep.subr.mxu0 0.0
        %584 = vmatpush1.msra.mxu0 0.0
        %585 = vmatprep.subr.mxu0 0.0
        %586 = vmatpush1.msra.mxu0 0.0
        %587 = vmatprep.subr.mxu0 0.0
        %588 = vmatpush1.msra.mxu0 0.0
        %589 = vmatprep.subr.mxu0 0.0
        %590 = vmatpush1.msra.mxu0 0.0
        %591 = vmatprep.subr.mxu0 0.0
        %592 = vmatpush1.msra.mxu0 0.0
        %593 = vmatprep.mubr.f32.mxu0 0.0
        %594 = vmatmul.mubr.f32.gmra.mrb[0].mxu0 %v403
        %v595 = vpop.f32.mrb[0].mxu0
        %v596 = vadd.f32 %v526, %v595
        %v597 = vpop.f32.mrb[0].mxu0
        %598 = vdwg.mxu0
        %599 = vst [vmem:[%s364] sm:$0xff] %v596
        %v600 = vrot.slane %v596, 4
        %v601 = vadd.f32 %v596, %v600
        %v602 = vrot.slane %v601, 2
        %v603 = vadd.f32 %v601, %v602
        %v604 = vrot.slane %v603, 1
        %v605 = vadd.f32 %v603, %v604
        %v606 = vmul.f32 %v596, %v596
        %v607 = vrot.slane %v606, 4
        %v608 = vadd.f32 %v606, %v607
        %v609 = vrot.slane %v608, 2
        %v610 = vadd.f32 %v608, %v609
        %v611 = vrot.slane %v610, 1
        %v612 = vadd.f32 %v610, %v611
        %v613 = vsel %vm376, %v605, %v612
        %v614 = vld [vmem:[#allocation11] sm:$0xff]
        %v615 = vld [vmem:[#allocation11 + $0x8] sm:$0xff]
        %v616 = vld [vmem:[#allocation11 + $0x10] sm:$0xff]
        %v617 = vld [vmem:[#allocation11 + $0x18] sm:$0xff]
        %v618 = vld [vmem:[#allocation11 + $0x20] sm:$0xff]
        %v619 = vld [vmem:[#allocation11 + $0x28] sm:$0xff]
        %v620 = vld [vmem:[#allocation11 + $0x30] sm:$0xff]
        %v621 = vld [vmem:[#allocation11 + $0x38] sm:$0xff]
        %v622 = vld [vmem:[#allocation11 + $0x40] sm:$0xff]
        %v623 = vld [vmem:[#allocation11 + $0x48] sm:$0xff]
        %v624 = vld [vmem:[#allocation11 + $0x50] sm:$0xff]
        %v625 = vld [vmem:[#allocation11 + $0x58] sm:$0xff]
        %v626 = vld [vmem:[#allocation11 + $0x60] sm:$0xff]
        %v627 = vld [vmem:[#allocation11 + $0x68] sm:$0xff]
        %v628 = vld [vmem:[#allocation11 + $0x70] sm:$0xff]
        %v629 = vld [vmem:[#allocation11 + $0x78] sm:$0xff]
        %630 = vmatprep.subr.mxu0 0.0
        %631 = vmatpush1.msra.mxu0 %v614
        %632 = vmatprep.subr.mxu0 0.0
        %633 = vmatpush1.msra.mxu0 %v615
        %634 = vmatprep.subr.mxu0 0.0
        %635 = vmatpush1.msra.mxu0 %v616
        %636 = vmatprep.subr.mxu0 0.0
        %637 = vmatpush1.msra.mxu0 %v617
        %638 = vmatprep.subr.mxu0 0.0
        %639 = vmatpush1.msra.mxu0 %v618
        %640 = vmatprep.subr.mxu0 0.0
        %641 = vmatpush1.msra.mxu0 %v619
        %642 = vmatprep.subr.mxu0 0.0
        %643 = vmatpush1.msra.mxu0 %v620
        %644 = vmatprep.subr.mxu0 0.0
        %645 = vmatpush1.msra.mxu0 %v621
        %646 = vmatprep.subr.mxu0 0.0
        %647 = vmatpush1.msra.mxu0 %v622
        %648 = vmatprep.subr.mxu0 0.0
        %649 = vmatpush1.msra.mxu0 %v623
        %650 = vmatprep.subr.mxu0 0.0
        %651 = vmatpush1.msra.mxu0 %v624
        %652 = vmatprep.subr.mxu0 0.0
        %653 = vmatpush1.msra.mxu0 %v625
        %654 = vmatprep.subr.mxu0 0.0
        %655 = vmatpush1.msra.mxu0 %v626
        %656 = vmatprep.subr.mxu0 0.0
        %657 = vmatpush1.msra.mxu0 %v627
        %658 = vmatprep.subr.mxu0 0.0
        %659 = vmatpush1.msra.mxu0 %v628
        %660 = vmatprep.subr.mxu0 0.0
        %661 = vmatpush1.msra.mxu0 %v629
        %662 = vmatprep.subr.mxu0 0.0
        %663 = vmatpush1.msra.mxu0 0.0
        %664 = vmatprep.subr.mxu0 0.0
        %665 = vmatpush1.msra.mxu0 0.0
        %666 = vmatprep.subr.mxu0 0.0
        %667 = vmatpush1.msra.mxu0 0.0
        %668 = vmatprep.subr.mxu0 0.0
        %669 = vmatpush1.msra.mxu0 0.0
        %670 = vmatprep.subr.mxu0 0.0
        %671 = vmatpush1.msra.mxu0 0.0
        %672 = vmatprep.subr.mxu0 0.0
        %673 = vmatpush1.msra.mxu0 0.0
        %674 = vmatprep.subr.mxu0 0.0
        %675 = vmatpush1.msra.mxu0 0.0
        %676 = vmatprep.subr.mxu0 0.0
        %677 = vmatpush1.msra.mxu0 0.0
        %678 = vmatprep.subr.mxu0 0.0
        %679 = vmatpush1.msra.mxu0 0.0
        %680 = vmatprep.subr.mxu0 0.0
        %681 = vmatpush1.msra.mxu0 0.0
        %682 = vmatprep.subr.mxu0 0.0
        %683 = vmatpush1.msra.mxu0 0.0
        %684 = vmatprep.subr.mxu0 0.0
        %685 = vmatpush1.msra.mxu0 0.0
        %686 = vmatprep.subr.mxu0 0.0
        %687 = vmatpush1.msra.mxu0 0.0
        %688 = vmatprep.subr.mxu0 0.0
        %689 = vmatpush1.msra.mxu0 0.0
        %690 = vmatprep.subr.mxu0 0.0
        %691 = vmatpush1.msra.mxu0 0.0
        %692 = vmatprep.subr.mxu0 0.0
        %693 = vmatpush1.msra.mxu0 0.0
        %694 = vmatprep.mubr.f32.mxu0 0.0
        %695 = vmatmul.mubr.f32.gmra.mrb[0].mxu0 %v613
        %v696 = vpop.f32.mrb[0].mxu0
        %v697 = vadd.f32 0.0, %v696
        %v698 = vpop.f32.mrb[0].mxu0
        %699 = vdwg.mxu0
        %vm700 = vcmask 25600
        %701 = vst.msk [vmem:[%s371] sm:$0x3] %vm700, %v697
        %s702 = sand.u32 %s170, 1
        %s703 = scalar_lea.sflag [#allocation4], %s702
        %s704 = sand.u32 %s170, 1
        %s705 = smul.addr %s704, 8
        %s706 = scalar_lea.vmem [#allocation13], %s705
        %s707 = sand.u32 %s196, 1
        %s708 = scalar_lea.sflag [#allocation15], %s707
        %s709 = sand.u32 %s196, 1
        %s710 = smul.addr %s709, 2
        %s711 = scalar_lea.vmem [#allocation14], %s710
        // Predicated region
        $region69: #{resblock_pallas.3} parent=43 // pred_check
          %p712 = pneg %p180
        $region70: #{resblock_pallas.3} parent=43 // pred_check_branch
          %714 = sbr.rel (%p712) target = $region72
        $region71: #{resblock_pallas.3} parent=43 // pred_region
          %s716 = ssub.s32 128, 128
          %717 = vsyncadd %s703, %s716
          %s718 = smul.addr %s31, 128
          %s719 = scalar_lea.hbm %s6, %s718
          %s721 = sshll.u32 %s706, 4
          %s722 = int_to_ptr.vmem [resolvable:$true] %s721
          %724 = dma.vmem_to_hbm [thread:$0]  %s722, 128, %s719, %s703
        $region72: #{resblock_pallas.3} parent=43 // pred_fallthru
          _
        // Predicated region
        $region73: #{resblock_pallas.3} parent=43 // pred_check
          %p725 = pneg %p206
        $region74: #{resblock_pallas.3} parent=43 // pred_check_branch
          %727 = sbr.rel (%p725) target = $region76
        $region75: #{resblock_pallas.3} parent=43 // pred_region
          %s729 = ssub.s32 32, 32
          %730 = vsyncadd %s708, %s729
          %s731 = smul.addr %s31, 32
          %s732 = scalar_lea.hbm %s7, %s731
          %s734 = sshll.u32 %s711, 4
          %s735 = int_to_ptr.vmem [resolvable:$true] %s734
          %737 = dma.vmem_to_hbm [thread:$0]  %s735, 32, %s732, %s708
        $region76: #{resblock_pallas.3} parent=43 // pred_fallthru
          _
      $region44: #{resblock_pallas.3} parent=5 // pred_fallthru
        _
      %p738 = scmp.le.s32.totalorder 2, %s26
      // Predicated region
      $region77: #{resblock_pallas.3} parent=5 // pred_check
        %p739 = pneg %p738
      $region78: #{resblock_pallas.3} parent=5 // pred_check_branch
        %741 = sbr.rel (%p739) target = $region80
      $region79: #{resblock_pallas.3} parent=5 // pred_region
        %s742 = ssub.s32 %s26, 2
        // Predicated region
        $region81: #{resblock_pallas.3} parent=79 // pred_check
          %p743 = pneg %p186
        $region82: #{resblock_pallas.3} parent=79 // pred_check_branch
          %745 = sbr.rel (%p743) target = $region84
        $region83: #{resblock_pallas.3} parent=79 // pred_region
          %s746 = sand.u32 %s171, 1
          %s747 = scalar_lea.sflag [#allocation4], %s746
          %s748 = sand.u32 %s171, 1
          %s749 = smul.addr %s748, 8
          %s750 = scalar_lea.vmem [#allocation13], %s749
          %751 = dma.done %s747, 128
        $region84: #{resblock_pallas.3} parent=79 // pred_fallthru
          _
        // Predicated region
        $region85: #{resblock_pallas.3} parent=79 // pred_check
          %p752 = pneg %p212
        $region86: #{resblock_pallas.3} parent=79 // pred_check_branch
          %754 = sbr.rel (%p752) target = $region88
        $region87: #{resblock_pallas.3} parent=79 // pred_region
          %s755 = sand.u32 %s197, 1
          %s756 = scalar_lea.sflag [#allocation15], %s755
          %s757 = sand.u32 %s197, 1
          %s758 = smul.addr %s757, 2
          %s759 = scalar_lea.vmem [#allocation14], %s758
          %760 = dma.done %s756, 32
        $region88: #{resblock_pallas.3} parent=79 // pred_fallthru
          _
      $region80: #{resblock_pallas.3} parent=5 // pred_fallthru
        _
    $region6: #{resblock_pallas.3} parent=1 // loop_footer
      %s30 = sadd.s32 1, %s26
    $region7: #{resblock_pallas.3} parent=1 // loop_footer_branch
      %25 = sbr.rel target = $region3
    $region8: #{resblock_pallas.3} parent=1 // loop_exit
      _
    %761 = vsyncpa [#allocation3], 1
    %s762 = scalar_lea.sflag [#allocation3], 1
    %763 = vsyncpa %s762, 1
    %764 = vsyncpa [#allocation6], 1
    %765 = vsyncpa [#allocation9], 1
    %766 = vsyncpa [#allocation12], 1
    %767 = vsyncpa [#allocation4], 1
    %s768 = scalar_lea.sflag [#allocation4], 1
    %769 = vsyncpa %s768, 1
    %770 = vsyncpa [#allocation15], 1
    %s771 = scalar_lea.sflag [#allocation15], 1
    %772 = vsyncpa %s771, 1

// kernel: resblock_pallas.5
$region0: #{resblock_pallas.5}
  #allocation0 [shape = 'u32[]', space=smem, size = 0x4, offset = 0x4, fixed_abs, tag = 'smem constant byte address 0x4 - core index']
  #allocation1 [shape = 'u32[144,128]{1,0:T(1,128)}', space=vmem, size = 0x12000, scoped, tag = 'internal scratch']
  %s0 = inlined_call_operand.hbm [shape: f32[2,8,128], index: 0, kind: input, shape index: {}]
  %s1 = inlined_call_operand.hbm [shape: f32[2,8,128], index: 1, kind: input, shape index: {}]
  %s2 = inlined_call_operand.hbm [shape: f32[1,128], index: 2, kind: input, shape index: {}]
  %s3 = inlined_call_operand.hbm [shape: f32[1,128], index: 3, kind: input, shape index: {}]
  %s4 = inlined_call_operand.hbm [shape: f32[2,8,128], index: 4, kind: output, shape index: {}]
  %s5 = sld [smem:[#allocation0]]
  $region65: #{resblock_pallas.5} parent=0
    _
  %s7 = ssub.s32 1, %s5
  %s8 = scalar_select 0, %s7, %s5
  $region1: #{resblock_pallas.5} parent=0
    #allocation2 [shape = 'u8[8192]{0}', space=vmem, size = 0x2000, scoped, tag = 'input window, operand 0']
    #allocation3 [shape = 's32[2]{0}', space=sflag, size = 0x8, scoped, tag = 'scoped memory for resblock_pallas.5']
    #allocation4 [shape = 's32[2]{0}', space=sflag, size = 0x8, scoped, tag = 'scoped memory for resblock_pallas.5']
    #allocation5 [shape = 'u8[8192]{0}', space=vmem, size = 0x2000, scoped, tag = 'input window, operand 1']
    #allocation6 [shape = 's32[2]{0}', space=sflag, size = 0x8, scoped, tag = 'scoped memory for resblock_pallas.5']
    #allocation7 [shape = 'u8[512]{0}', space=vmem, size = 0x400, scoped, tag = 'input window, operand 2, single buffered']
    #allocation8 [shape = 'u8[512]{0}', space=vmem, size = 0x400, scoped, tag = 'input window, operand 3, single buffered']
    #allocation9 [shape = 's32[1]{0}', space=sflag, size = 0x4, scoped, tag = 'scoped memory for resblock_pallas.5']
    #allocation10 [shape = 'u8[8192]{0}', space=vmem, size = 0x2000, scoped, tag = 'output window, operand 0']
    %9 = vsyncpa [#allocation3], 0
    %s10 = scalar_lea.sflag [#allocation3], 1
    %11 = vsyncpa %s10, 0
    %12 = vsyncpa [#allocation6], 0
    %s13 = scalar_lea.sflag [#allocation6], 1
    %14 = vsyncpa %s13, 0
    %15 = vsyncpa [#allocation9], 0
    %16 = vsyncpa [#allocation4], 0
    %s17 = scalar_lea.sflag [#allocation4], 1
    %18 = vsyncpa %s17, 0
    loop: start=0, step=1, limit=4
    $region2: #{resblock_pallas.5} parent=1 // loop_pre_header
      _
    $region3: #{resblock_pallas.5} parent=1 // loop_header
      %s20 = sphi 0, %s24
      %p21 = scmp.ge.s32.totalorder %s20, 4
      %s30 = sphi 0, %s32
      %s33 = sphi 0, %s30
      %s34 = sphi 0, %s33
      %s50 = sphi 0, %s34
      %s56 = sphi 0, %s58
      %s59 = sphi 0, %s56
      %s60 = sphi 0, %s59
      %s76 = sphi 0, %s60
      %s80 = sphi 0, %s80
      %s82 = sphi 0, %s80
      %s83 = sphi 0, %s82
      %s97 = sphi 0, %s83
      %s101 = sphi 0, %s101
      %s103 = sphi 0, %s101
      %s104 = sphi 0, %s103
      %s118 = sphi 0, %s104
      %s124 = sphi 0, %s126
      %s127 = sphi 0, %s124
      %s128 = sphi 0, %s127
      %s144 = sphi 0, %s128
    $region4: #{resblock_pallas.5} parent=1 // loop_header_branch
      %23 = sbr.rel (%p21) target = $region8
    $region5: #{resblock_pallas.5} parent=1 // loop_body
      %s25 = ssub.s32 %s20, 1
      %s26 = ssub.s32 %s20, 2
      %s27 = sadd.s32 %s20, 1
      %s28 = ssub.s32 %s20, %s27
      %p29 = scmp.eq.s32.totalorder %s28, 0
      %s31 = sadd.s32 %s30, 1
      %s32 = scalar_select %p29, %s30, %s31
      %p35 = pneg %p29
      %p36 = scmp.eq.s32.totalorder %s20, 1
      %p37 = por %p35, %p36
      %p38 = scmp.ne.s32.totalorder %s30, %s33
      %p39 = scmp.eq.s32.totalorder %s20, 0
      %p40 = por %p38, %p39
      %p41 = scmp.ne.s32.totalorder %s30, %s33
      %p42 = scmp.eq.s32.totalorder %s25, 1
      %p43 = por %p41, %p42
      %p44 = scmp.ne.s32.totalorder %s33, %s34
      %p45 = scmp.eq.s32.totalorder %s25, 0
      %p46 = por %p44, %p45
      %p47 = scmp.ne.s32.totalorder %s33, %s34
      %p48 = scmp.eq.s32.totalorder %s26, 1
      %p49 = por %p47, %p48
      %p51 = scmp.ne.s32.totalorder %s34, %s50
      %p52 = scmp.eq.s32.totalorder %s26, 0
      %p53 = por %p51, %p52
      %s54 = ssub.s32 %s20, %s27
      %p55 = scmp.eq.s32.totalorder %s54, 0
      %s57 = sadd.s32 %s56, 1
      %s58 = scalar_select %p55, %s56, %s57
      %p61 = pneg %p55
      %p62 = scmp.eq.s32.totalorder %s20, 1
      %p63 = por %p61, %p62
      %p64 = scmp.ne.s32.totalorder %s56, %s59
      %p65 = scmp.eq.s32.totalorder %s20, 0
      %p66 = por %p64, %p65
      %p67 = scmp.ne.s32.totalorder %s56, %s59
      %p68 = scmp.eq.s32.totalorder %s25, 1
      %p69 = por %p67, %p68
      %p70 = scmp.ne.s32.totalorder %s59, %s60
      %p71 = scmp.eq.s32.totalorder %s25, 0
      %p72 = por %p70, %p71
      %p73 = scmp.ne.s32.totalorder %s59, %s60
      %p74 = scmp.eq.s32.totalorder %s26, 1
      %p75 = por %p73, %p74
      %p77 = scmp.ne.s32.totalorder %s60, %s76
      %p78 = scmp.eq.s32.totalorder %s26, 0
      %p79 = por %p77, %p78
      %s81 = sadd.s32 %s80, 1
      %p84 = scmp.eq.s32.totalorder %s20, 1
      %p85 = scmp.ne.s32.totalorder %s80, %s82
      %p86 = scmp.eq.s32.totalorder %s20, 0
      %p87 = por %p85, %p86
      %p88 = scmp.ne.s32.totalorder %s80, %s82
      %p89 = scmp.eq.s32.totalorder %s25, 1
      %p90 = por %p88, %p89
      %p91 = scmp.ne.s32.totalorder %s82, %s83
      %p92 = scmp.eq.s32.totalorder %s25, 0
      %p93 = por %p91, %p92
      %p94 = scmp.ne.s32.totalorder %s82, %s83
      %p95 = scmp.eq.s32.totalorder %s26, 1
      %p96 = por %p94, %p95
      %p98 = scmp.ne.s32.totalorder %s83, %s97
      %p99 = scmp.eq.s32.totalorder %s26, 0
      %p100 = por %p98, %p99
      %s102 = sadd.s32 %s101, 1
      %p105 = scmp.eq.s32.totalorder %s20, 1
      %p106 = scmp.ne.s32.totalorder %s101, %s103
      %p107 = scmp.eq.s32.totalorder %s20, 0
      %p108 = por %p106, %p107
      %p109 = scmp.ne.s32.totalorder %s101, %s103
      %p110 = scmp.eq.s32.totalorder %s25, 1
      %p111 = por %p109, %p110
      %p112 = scmp.ne.s32.totalorder %s103, %s104
      %p113 = scmp.eq.s32.totalorder %s25, 0
      %p114 = por %p112, %p113
      %p115 = scmp.ne.s32.totalorder %s103, %s104
      %p116 = scmp.eq.s32.totalorder %s26, 1
      %p117 = por %p115, %p116
      %p119 = scmp.ne.s32.totalorder %s104, %s118
      %p120 = scmp.eq.s32.totalorder %s26, 0
      %p121 = por %p119, %p120
      %s122 = ssub.s32 %s20, %s27
      %p123 = scmp.eq.s32.totalorder %s122, 0
      %s125 = sadd.s32 %s124, 1
      %s126 = scalar_select %p123, %s124, %s125
      %p129 = pneg %p123
      %p130 = scmp.eq.s32.totalorder %s20, 1
      %p131 = por %p129, %p130
      %p132 = scmp.ne.s32.totalorder %s124, %s127
      %p133 = scmp.eq.s32.totalorder %s20, 0
      %p134 = por %p132, %p133
      %p135 = scmp.ne.s32.totalorder %s124, %s127
      %p136 = scmp.eq.s32.totalorder %s25, 1
      %p137 = por %p135, %p136
      %p138 = scmp.ne.s32.totalorder %s127, %s128
      %p139 = scmp.eq.s32.totalorder %s25, 0
      %p140 = por %p138, %p139
      %p141 = scmp.ne.s32.totalorder %s127, %s128
      %p142 = scmp.eq.s32.totalorder %s26, 1
      %p143 = por %p141, %p142
      %p145 = scmp.ne.s32.totalorder %s128, %s144
      %p146 = scmp.eq.s32.totalorder %s26, 0
      %p147 = por %p145, %p146
      %p148 = scmp.le.s32.totalorder 1, %s20
      %p149 = scmp.lt.s32.totalorder %s20, 3
      %p150 = pnand %p148, %p149
      %p151 = pneg %p150
      // Predicated region
      $region9: #{resblock_pallas.5} parent=5 // pred_check
        _
      $region10: #{resblock_pallas.5} parent=5 // pred_check_branch
        %153 = sbr.rel (%p150) target = $region12
      $region11: #{resblock_pallas.5} parent=5 // pred_region
        %s154 = ssub.s32 %s20, 1
        // Predicated region
        $region13: #{resblock_pallas.5} parent=11 // pred_check
          %p155 = pneg %p93
        $region14: #{resblock_pallas.5} parent=11 // pred_check_branch
          %157 = sbr.rel (%p155) target = $region16
        $region15: #{resblock_pallas.5} parent=11 // pred_region
          %s159 = ssub.s32 16, 16
          %160 = vsyncadd [#allocation6], %s159
          %s162 = sshll.u32 [#allocation7], 4
          %s163 = int_to_ptr.vmem [resolvable:$true] %s162
          %165 = dma.hbm_to_vmem [thread:$0]  %s2, 16, %s163, [#allocation6]
        $region16: #{resblock_pallas.5} parent=11 // pred_fallthru
          _
        // Predicated region
        $region17: #{resblock_pallas.5} parent=11 // pred_check
          %p166 = pneg %p114
        $region18: #{resblock_pallas.5} parent=11 // pred_check_branch
          %168 = sbr.rel (%p166) target = $region20
        $region19: #{resblock_pallas.5} parent=11 // pred_region
          %s170 = ssub.s32 16, 16
          %171 = vsyncadd [#allocation9], %s170
          %s173 = sshll.u32 [#allocation8], 4
          %s174 = int_to_ptr.vmem [resolvable:$true] %s173
          %176 = dma.hbm_to_vmem [thread:$0]  %s3, 16, %s174, [#allocation9]
        $region20: #{resblock_pallas.5} parent=11 // pred_fallthru
          _
      $region12: #{resblock_pallas.5} parent=5 // pred_fallthru
        _
      %p177 = scmp.lt.s32.totalorder %s20, 2
      // Predicated region
      $region21: #{resblock_pallas.5} parent=5 // pred_check
        %p178 = pneg %p177
      $region22: #{resblock_pallas.5} parent=5 // pred_check_branch
        %180 = sbr.rel (%p178) target = $region24
      $region23: #{resblock_pallas.5} parent=5 // pred_region
        // Predicated region
        $region25: #{resblock_pallas.5} parent=23 // pred_check
          %p181 = pneg %p40
        $region26: #{resblock_pallas.5} parent=23 // pred_check_branch
          %183 = sbr.rel (%p181) target = $region28
        $region27: #{resblock_pallas.5} parent=23 // pred_region
          %s184 = sand.u32 %s30, 1
          %s185 = scalar_lea.sflag [#allocation3], %s184
          %s186 = sand.u32 %s30, 1
          %s187 = smul.addr %s186, 8
          %s188 = scalar_lea.vmem [#allocation2], %s187
          %s190 = ssub.s32 128, 128
          %191 = vsyncadd %s185, %s190
          %s192 = smul.addr %s20, 128
          %s193 = scalar_lea.hbm %s0, %s192
          %s195 = sshll.u32 %s188, 4
          %s196 = int_to_ptr.vmem [resolvable:$true] %s195
          %198 = dma.hbm_to_vmem [thread:$0]  %s193, 128, %s196, %s185
        $region28: #{resblock_pallas.5} parent=23 // pred_fallthru
          _
        // Predicated region
        $region29: #{resblock_pallas.5} parent=23 // pred_check
          %p199 = pneg %p66
        $region30: #{resblock_pallas.5} parent=23 // pred_check_branch
          %201 = sbr.rel (%p199) target = $region32
        $region31: #{resblock_pallas.5} parent=23 // pred_region
          %s202 = sand.u32 %s20, 1
          %s203 = scalar_lea.sflag [#allocation6], %s202
          %s204 = sand.u32 %s56, 1
          %s205 = smul.addr %s204, 8
          %s206 = scalar_lea.vmem [#allocation5], %s205
          %s208 = ssub.s32 128, 128
          %209 = vsyncadd %s203, %s208
          %s210 = smul.addr %s20, 128
          %s211 = scalar_lea.hbm %s1, %s210
          %s213 = sshll.u32 %s206, 4
          %s214 = int_to_ptr.vmem [resolvable:$true] %s213
          %216 = dma.hbm_to_vmem [thread:$0]  %s211, 128, %s214, %s203
        $region32: #{resblock_pallas.5} parent=23 // pred_fallthru
          _
      $region24: #{resblock_pallas.5} parent=5 // pred_fallthru
        _
      %p217 = scmp.le.s32.totalorder 1, %s20
      %p218 = scmp.lt.s32.totalorder %s20, 3
      %p219 = pnand %p217, %p218
      %p220 = pneg %p219
      // Predicated region
      $region33: #{resblock_pallas.5} parent=5 // pred_check
        _
      $region34: #{resblock_pallas.5} parent=5 // pred_check_branch
        %222 = sbr.rel (%p219) target = $region36
      $region35: #{resblock_pallas.5} parent=5 // pred_region
        %s223 = ssub.s32 %s20, 1
        %s224 = sand.u32 %s33, 1
        %s225 = scalar_lea.sflag [#allocation3], %s224
        %s226 = sand.u32 %s33, 1
        %s227 = smul.addr %s226, 8
        %s228 = scalar_lea.vmem [#allocation2], %s227
        // Predicated region
        $region37: #{resblock_pallas.5} parent=35 // pred_check
          %p229 = pneg %p46
        $region38: #{resblock_pallas.5} parent=35 // pred_check_branch
          %231 = sbr.rel (%p229) target = $region40
        $region39: #{resblock_pallas.5} parent=35 // pred_region
          %232 = dma.done %s225, 128
        $region40: #{resblock_pallas.5} parent=35 // pred_fallthru
          _
        %s233 = sand.u32 %s25, 1
        %s234 = scalar_lea.sflag [#allocation6], %s233
        %s235 = sand.u32 %s59, 1
        %s236 = smul.addr %s235, 8
        %s237 = scalar_lea.vmem [#allocation5], %s236
        // Predicated region
        $region41: #{resblock_pallas.5} parent=35 // pred_check
          %p238 = pneg %p72
        $region42: #{resblock_pallas.5} parent=35 // pred_check_branch
          %240 = sbr.rel (%p238) target = $region44
        $region43: #{resblock_pallas.5} parent=35 // pred_region
          %241 = dma.done %s234, 128
        $region44: #{resblock_pallas.5} parent=35 // pred_fallthru
          _
        // Predicated region
        $region45: #{resblock_pallas.5} parent=35 // pred_check
          %p242 = pneg %p93
        $region46: #{resblock_pallas.5} parent=35 // pred_check_branch
          %244 = sbr.rel (%p242) target = $region48
        $region47: #{resblock_pallas.5} parent=35 // pred_region
          %245 = dma.done [#allocation6], 16
        $region48: #{resblock_pallas.5} parent=35 // pred_fallthru
          _
        // Predicated region
        $region49: #{resblock_pallas.5} parent=35 // pred_check
          %p246 = pneg %p114
        $region50: #{resblock_pallas.5} parent=35 // pred_check_branch
          %248 = sbr.rel (%p246) target = $region52
        $region51: #{resblock_pallas.5} parent=35 // pred_region
          %249 = dma.done [#allocation9], 16
        $region52: #{resblock_pallas.5} parent=35 // pred_fallthru
          _
        %s250 = sand.u32 %s33, 1
        %s251 = scalar_lea.sflag [#allocation3], %s250
        %s252 = sand.u32 %s33, 1
        %s253 = smul.addr %s252, 8
        %s254 = scalar_lea.vmem [#allocation2], %s253
        %p255 = pneg %p46
        %p256 = pneg %p43
        %s257 = sand.u32 %s25, 1
        %s258 = scalar_lea.sflag [#allocation6], %s257
        %s259 = sand.u32 %s59, 1
        %s260 = smul.addr %s259, 8
        %s261 = scalar_lea.vmem [#allocation5], %s260
        %p262 = pneg %p72
        %p263 = pneg %p69
        %p264 = pneg %p93
        %p265 = pneg %p90
        %p266 = pneg %p114
        %p267 = pneg %p111
        %p268 = pneg %p140
        %p269 = pneg %p137
        %s270 = sand.u32 %s127, 1
        %s271 = scalar_lea.sflag [#allocation4], %s270
        %s272 = sand.u32 %s127, 1
        %s273 = smul.addr %s272, 8
        %s274 = scalar_lea.vmem [#allocation10], %s273
        %v275 = vld [vmem:[%s237] sm:$0xff]
        %v276 = vld [vmem:[#allocation7] sm:$0x1]
        %v278 = vlaneseq
        %v279 = vshrl.u32 %v278, 7
        %v280 = vsub.s32 0, %v279
        %v281 = vrot.slane %v276, %v280
        %v283 = vmul.f32 %v275, %v281
        %v284 = vld [vmem:[#allocation8] sm:$0x1]
        %v286 = vlaneseq
        %v287 = vshrl.u32 %v286, 7
        %v288 = vsub.s32 0, %v287
        %v289 = vrot.slane %v284, %v288
        %v291 = vadd.f32 %v283, %v289
        %v292 = vmax.f32 %v291, 0.0
        %v293 = vld [vmem:[%s228] sm:$0xff]
        %v294 = vadd.f32 %v293, %v292
        %295 = vst [vmem:[%s274] sm:$0xff] %v294
        %s296 = sand.u32 %s127, 1
        %s297 = scalar_lea.sflag [#allocation4], %s296
        %s298 = sand.u32 %s127, 1
        %s299 = smul.addr %s298, 8
        %s300 = scalar_lea.vmem [#allocation10], %s299
        // Predicated region
        $region53: #{resblock_pallas.5} parent=35 // pred_check
          %p301 = pneg %p137
        $region54: #{resblock_pallas.5} parent=35 // pred_check_branch
          %303 = sbr.rel (%p301) target = $region56
        $region55: #{resblock_pallas.5} parent=35 // pred_region
          %s305 = ssub.s32 128, 128
          %306 = vsyncadd %s297, %s305
          %s307 = smul.addr %s25, 128
          %s308 = scalar_lea.hbm %s4, %s307
          %s310 = sshll.u32 %s300, 4
          %s311 = int_to_ptr.vmem [resolvable:$true] %s310
          %313 = dma.vmem_to_hbm [thread:$0]  %s311, 128, %s308, %s297
        $region56: #{resblock_pallas.5} parent=35 // pred_fallthru
          _
      $region36: #{resblock_pallas.5} parent=5 // pred_fallthru
        _
      %p314 = scmp.le.s32.totalorder 2, %s20
      // Predicated region
      $region57: #{resblock_pallas.5} parent=5 // pred_check
        %p315 = pneg %p314
      $region58: #{resblock_pallas.5} parent=5 // pred_check_branch
        %317 = sbr.rel (%p315) target = $region60
      $region59: #{resblock_pallas.5} parent=5 // pred_region
        %s318 = ssub.s32 %s20, 2
        // Predicated region
        $region61: #{resblock_pallas.5} parent=59 // pred_check
          %p319 = pneg %p143
        $region62: #{resblock_pallas.5} parent=59 // pred_check_branch
          %321 = sbr.rel (%p319) target = $region64
        $region63: #{resblock_pallas.5} parent=59 // pred_region
          %s322 = sand.u32 %s128, 1
          %s323 = scalar_lea.sflag [#allocation4], %s322
          %s324 = sand.u32 %s128, 1
          %s325 = smul.addr %s324, 8
          %s326 = scalar_lea.vmem [#allocation10], %s325
          %327 = dma.done %s323, 128
        $region64: #{resblock_pallas.5} parent=59 // pred_fallthru
          _
      $region60: #{resblock_pallas.5} parent=5 // pred_fallthru
        _
    $region6: #{resblock_pallas.5} parent=1 // loop_footer
      %s24 = sadd.s32 1, %s20
    $region7: #{resblock_pallas.5} parent=1 // loop_footer_branch
      %19 = sbr.rel target = $region3
    $region8: #{resblock_pallas.5} parent=1 // loop_exit
      _
    %328 = vsyncpa [#allocation3], 1
    %s329 = scalar_lea.sflag [#allocation3], 1
    %330 = vsyncpa %s329, 1
    %331 = vsyncpa [#allocation6], 1
    %s332 = scalar_lea.sflag [#allocation6], 1
    %333 = vsyncpa %s332, 1
    %334 = vsyncpa [#allocation9], 1
    %335 = vsyncpa [#allocation4], 1
    %s336 = scalar_lea.sflag [#allocation4], 1
    %337 = vsyncpa %s336, 1

// kernel: resblock_pallas.4
$region0: #{resblock_pallas.4}
  #allocation0 [shape = 'u32[]', space=smem, size = 0x4, offset = 0x4, fixed_abs, tag = 'smem constant byte address 0x4 - core index']
  #allocation1 [shape = 'u32[144,128]{1,0:T(1,128)}', space=vmem, size = 0x12000, scoped, tag = 'internal scratch']
  %s0 = inlined_call_operand.hbm [shape: f32[2,8,128], index: 0, kind: input, shape index: {}]
  %s1 = inlined_call_operand.hbm [shape: f32[1,128], index: 1, kind: input, shape index: {}]
  %s2 = inlined_call_operand.hbm [shape: f32[1,128], index: 2, kind: input, shape index: {}]
  %s3 = inlined_call_operand.hbm [shape: f32[384,128], index: 3, kind: input, shape index: {}]
  %s4 = inlined_call_operand.hbm [shape: f32[1,128], index: 4, kind: input, shape index: {}]
  %s5 = inlined_call_operand.hbm [shape: f32[128,4], index: 5, kind: input, shape index: {}]
  %s6 = inlined_call_operand.hbm [shape: f32[2,8,128], index: 6, kind: output, shape index: {0}]
  %s7 = inlined_call_operand.hbm [shape: f32[2,2,4], index: 7, kind: output, shape index: {1}]
  %8 = xla_tuple %s6, %s7
  %s9 = sld [smem:[#allocation0]]
  $region89: #{resblock_pallas.4} parent=0
    _
  %s11 = ssub.s32 1, %s9
  %s12 = scalar_select 0, %s11, %s9
  $region1: #{resblock_pallas.4} parent=0
    #allocation2 [shape = 'u8[8192]{0}', space=vmem, size = 0x2000, scoped, tag = 'input window, operand 0']
    #allocation3 [shape = 's32[2]{0}', space=sflag, size = 0x8, scoped, tag = 'scoped memory for resblock_pallas.4']
    #allocation4 [shape = 's32[2]{0}', space=sflag, size = 0x8, scoped, tag = 'scoped memory for resblock_pallas.4']
    #allocation5 [shape = 'u8[512]{0}', space=vmem, size = 0x400, scoped, tag = 'input window, operand 1, single buffered']
    #allocation6 [shape = 's32[1]{0}', space=sflag, size = 0x4, scoped, tag = 'scoped memory for resblock_pallas.4']
    #allocation7 [shape = 'u8[512]{0}', space=vmem, size = 0x400, scoped, tag = 'input window, operand 2, single buffered']
    #allocation8 [shape = 'u8[196608]{0}', space=vmem, size = 0x30000, scoped, tag = 'input window, operand 3, single buffered']
    #allocation9 [shape = 's32[1]{0}', space=sflag, size = 0x4, scoped, tag = 'scoped memory for resblock_pallas.4']
    #allocation10 [shape = 'u8[512]{0}', space=vmem, size = 0x400, scoped, tag = 'input window, operand 4, single buffered']
    #allocation11 [shape = 'u8[65536]{0}', space=vmem, size = 0x10000, scoped, tag = 'input window, operand 5, single buffered']
    #allocation12 [shape = 's32[1]{0}', space=sflag, size = 0x4, scoped, tag = 'scoped memory for resblock_pallas.4']
    #allocation13 [shape = 'u8[8192]{0}', space=vmem, size = 0x2000, scoped, tag = 'output window, operand 0']
    #allocation14 [shape = 'u8[2048]{0}', space=vmem, size = 0x800, scoped, tag = 'output window, operand 1']
    #allocation15 [shape = 's32[2]{0}', space=sflag, size = 0x8, scoped, tag = 'scoped memory for resblock_pallas.4']
    %13 = vsyncpa [#allocation3], 0
    %s14 = scalar_lea.sflag [#allocation3], 1
    %15 = vsyncpa %s14, 0
    %16 = vsyncpa [#allocation6], 0
    %17 = vsyncpa [#allocation9], 0
    %18 = vsyncpa [#allocation12], 0
    %19 = vsyncpa [#allocation4], 0
    %s20 = scalar_lea.sflag [#allocation4], 1
    %21 = vsyncpa %s20, 0
    %22 = vsyncpa [#allocation15], 0
    %s23 = scalar_lea.sflag [#allocation15], 1
    %24 = vsyncpa %s23, 0
    loop: start=0, step=1, limit=4
    $region2: #{resblock_pallas.4} parent=1 // loop_pre_header
      _
    $region3: #{resblock_pallas.4} parent=1 // loop_header
      %s26 = sphi 0, %s30
      %p27 = scmp.ge.s32.totalorder %s26, 4
      %s36 = sphi 0, %s38
      %s39 = sphi 0, %s36
      %s40 = sphi 0, %s39
      %s56 = sphi 0, %s40
      %s60 = sphi 0, %s60
      %s62 = sphi 0, %s60
      %s63 = sphi 0, %s62
      %s77 = sphi 0, %s63
      %s81 = sphi 0, %s81
      %s83 = sphi 0, %s81
      %s84 = sphi 0, %s83
      %s98 = sphi 0, %s84
      %s102 = sphi 0, %s102
      %s104 = sphi 0, %s102
      %s105 = sphi 0, %s104
      %s119 = sphi 0, %s105
      %s123 = sphi 0, %s123
      %s125 = sphi 0, %s123
      %s126 = sphi 0, %s125
      %s140 = sphi 0, %s126
      %s144 = sphi 0, %s144
      %s146 = sphi 0, %s144
      %s147 = sphi 0, %s146
      %s161 = sphi 0, %s147
      %s167 = sphi 0, %s169
      %s170 = sphi 0, %s167
      %s171 = sphi 0, %s170
      %s187 = sphi 0, %s171
      %s193 = sphi 0, %s195
      %s196 = sphi 0, %s193
      %s197 = sphi 0, %s196
      %s213 = sphi 0, %s197
    $region4: #{resblock_pallas.4} parent=1 // loop_header_branch
      %29 = sbr.rel (%p27) target = $region8
    $region5: #{resblock_pallas.4} parent=1 // loop_body
      %s31 = ssub.s32 %s26, 1
      %s32 = ssub.s32 %s26, 2
      %s33 = sadd.s32 %s26, 1
      %s34 = ssub.s32 %s26, %s33
      %p35 = scmp.eq.s32.totalorder %s34, 0
      %s37 = sadd.s32 %s36, 1
      %s38 = scalar_select %p35, %s36, %s37
      %p41 = pneg %p35
      %p42 = scmp.eq.s32.totalorder %s26, 1
      %p43 = por %p41, %p42
      %p44 = scmp.ne.s32.totalorder %s36, %s39
      %p45 = scmp.eq.s32.totalorder %s26, 0
      %p46 = por %p44, %p45
      %p47 = scmp.ne.s32.totalorder %s36, %s39
      %p48 = scmp.eq.s32.totalorder %s31, 1
      %p49 = por %p47, %p48
      %p50 = scmp.ne.s32.totalorder %s39, %s40
      %p51 = scmp.eq.s32.totalorder %s31, 0
      %p52 = por %p50, %p51
      %p53 = scmp.ne.s32.totalorder %s39, %s40
      %p54 = scmp.eq.s32.totalorder %s32, 1
      %p55 = por %p53, %p54
      %p57 = scmp.ne.s32.totalorder %s40, %s56
      %p58 = scmp.eq.s32.totalorder %s32, 0
      %p59 = por %p57, %p58
      %s61 = sadd.s32 %s60, 1
      %p64 = scmp.eq.s32.totalorder %s26, 1
      %p65 = scmp.ne.s32.totalorder %s60, %s62
      %p66 = scmp.eq.s32.totalorder %s26, 0
      %p67 = por %p65, %p66
      %p68 = scmp.ne.s32.totalorder %s60, %s62
      %p69 = scmp.eq.s32.totalorder %s31, 1
      %p70 = por %p68, %p69
      %p71 = scmp.ne.s32.totalorder %s62, %s63
      %p72 = scmp.eq.s32.totalorder %s31, 0
      %p73 = por %p71, %p72
      %p74 = scmp.ne.s32.totalorder %s62, %s63
      %p75 = scmp.eq.s32.totalorder %s32, 1
      %p76 = por %p74, %p75
      %p78 = scmp.ne.s32.totalorder %s63, %s77
      %p79 = scmp.eq.s32.totalorder %s32, 0
      %p80 = por %p78, %p79
      %s82 = sadd.s32 %s81, 1
      %p85 = scmp.eq.s32.totalorder %s26, 1
      %p86 = scmp.ne.s32.totalorder %s81, %s83
      %p87 = scmp.eq.s32.totalorder %s26, 0
      %p88 = por %p86, %p87
      %p89 = scmp.ne.s32.totalorder %s81, %s83
      %p90 = scmp.eq.s32.totalorder %s31, 1
      %p91 = por %p89, %p90
      %p92 = scmp.ne.s32.totalorder %s83, %s84
      %p93 = scmp.eq.s32.totalorder %s31, 0
      %p94 = por %p92, %p93
      %p95 = scmp.ne.s32.totalorder %s83, %s84
      %p96 = scmp.eq.s32.totalorder %s32, 1
      %p97 = por %p95, %p96
      %p99 = scmp.ne.s32.totalorder %s84, %s98
      %p100 = scmp.eq.s32.totalorder %s32, 0
      %p101 = por %p99, %p100
      %s103 = sadd.s32 %s102, 1
      %p106 = scmp.eq.s32.totalorder %s26, 1
      %p107 = scmp.ne.s32.totalorder %s102, %s104
      %p108 = scmp.eq.s32.totalorder %s26, 0
      %p109 = por %p107, %p108
      %p110 = scmp.ne.s32.totalorder %s102, %s104
      %p111 = scmp.eq.s32.totalorder %s31, 1
      %p112 = por %p110, %p111
      %p113 = scmp.ne.s32.totalorder %s104, %s105
      %p114 = scmp.eq.s32.totalorder %s31, 0
      %p115 = por %p113, %p114
      %p116 = scmp.ne.s32.totalorder %s104, %s105
      %p117 = scmp.eq.s32.totalorder %s32, 1
      %p118 = por %p116, %p117
      %p120 = scmp.ne.s32.totalorder %s105, %s119
      %p121 = scmp.eq.s32.totalorder %s32, 0
      %p122 = por %p120, %p121
      %s124 = sadd.s32 %s123, 1
      %p127 = scmp.eq.s32.totalorder %s26, 1
      %p128 = scmp.ne.s32.totalorder %s123, %s125
      %p129 = scmp.eq.s32.totalorder %s26, 0
      %p130 = por %p128, %p129
      %p131 = scmp.ne.s32.totalorder %s123, %s125
      %p132 = scmp.eq.s32.totalorder %s31, 1
      %p133 = por %p131, %p132
      %p134 = scmp.ne.s32.totalorder %s125, %s126
      %p135 = scmp.eq.s32.totalorder %s31, 0
      %p136 = por %p134, %p135
      %p137 = scmp.ne.s32.totalorder %s125, %s126
      %p138 = scmp.eq.s32.totalorder %s32, 1
      %p139 = por %p137, %p138
      %p141 = scmp.ne.s32.totalorder %s126, %s140
      %p142 = scmp.eq.s32.totalorder %s32, 0
      %p143 = por %p141, %p142
      %s145 = sadd.s32 %s144, 1
      %p148 = scmp.eq.s32.totalorder %s26, 1
      %p149 = scmp.ne.s32.totalorder %s144, %s146
      %p150 = scmp.eq.s32.totalorder %s26, 0
      %p151 = por %p149, %p150
      %p152 = scmp.ne.s32.totalorder %s144, %s146
      %p153 = scmp.eq.s32.totalorder %s31, 1
      %p154 = por %p152, %p153
      %p155 = scmp.ne.s32.totalorder %s146, %s147
      %p156 = scmp.eq.s32.totalorder %s31, 0
      %p157 = por %p155, %p156
      %p158 = scmp.ne.s32.totalorder %s146, %s147
      %p159 = scmp.eq.s32.totalorder %s32, 1
      %p160 = por %p158, %p159
      %p162 = scmp.ne.s32.totalorder %s147, %s161
      %p163 = scmp.eq.s32.totalorder %s32, 0
      %p164 = por %p162, %p163
      %s165 = ssub.s32 %s26, %s33
      %p166 = scmp.eq.s32.totalorder %s165, 0
      %s168 = sadd.s32 %s167, 1
      %s169 = scalar_select %p166, %s167, %s168
      %p172 = pneg %p166
      %p173 = scmp.eq.s32.totalorder %s26, 1
      %p174 = por %p172, %p173
      %p175 = scmp.ne.s32.totalorder %s167, %s170
      %p176 = scmp.eq.s32.totalorder %s26, 0
      %p177 = por %p175, %p176
      %p178 = scmp.ne.s32.totalorder %s167, %s170
      %p179 = scmp.eq.s32.totalorder %s31, 1
      %p180 = por %p178, %p179
      %p181 = scmp.ne.s32.totalorder %s170, %s171
      %p182 = scmp.eq.s32.totalorder %s31, 0
      %p183 = por %p181, %p182
      %p184 = scmp.ne.s32.totalorder %s170, %s171
      %p185 = scmp.eq.s32.totalorder %s32, 1
      %p186 = por %p184, %p185
      %p188 = scmp.ne.s32.totalorder %s171, %s187
      %p189 = scmp.eq.s32.totalorder %s32, 0
      %p190 = por %p188, %p189
      %s191 = ssub.s32 %s26, %s33
      %p192 = scmp.eq.s32.totalorder %s191, 0
      %s194 = sadd.s32 %s193, 1
      %s195 = scalar_select %p192, %s193, %s194
      %p198 = pneg %p192
      %p199 = scmp.eq.s32.totalorder %s26, 1
      %p200 = por %p198, %p199
      %p201 = scmp.ne.s32.totalorder %s193, %s196
      %p202 = scmp.eq.s32.totalorder %s26, 0
      %p203 = por %p201, %p202
      %p204 = scmp.ne.s32.totalorder %s193, %s196
      %p205 = scmp.eq.s32.totalorder %s31, 1
      %p206 = por %p204, %p205
      %p207 = scmp.ne.s32.totalorder %s196, %s197
      %p208 = scmp.eq.s32.totalorder %s31, 0
      %p209 = por %p207, %p208
      %p210 = scmp.ne.s32.totalorder %s196, %s197
      %p211 = scmp.eq.s32.totalorder %s32, 1
      %p212 = por %p210, %p211
      %p214 = scmp.ne.s32.totalorder %s197, %s213
      %p215 = scmp.eq.s32.totalorder %s32, 0
      %p216 = por %p214, %p215
      %p217 = scmp.le.s32.totalorder 1, %s26
      %p218 = scmp.lt.s32.totalorder %s26, 3
      %p219 = pnand %p217, %p218
      %p220 = pneg %p219
      // Predicated region
      $region9: #{resblock_pallas.4} parent=5 // pred_check
        _
      $region10: #{resblock_pallas.4} parent=5 // pred_check_branch
        %222 = sbr.rel (%p219) target = $region12
      $region11: #{resblock_pallas.4} parent=5 // pred_region
        %s223 = ssub.s32 %s26, 1
        // Predicated region
        $region13: #{resblock_pallas.4} parent=11 // pred_check
          %p224 = pneg %p73
        $region14: #{resblock_pallas.4} parent=11 // pred_check_branch
          %226 = sbr.rel (%p224) target = $region16
        $region15: #{resblock_pallas.4} parent=11 // pred_region
          %s228 = ssub.s32 16, 16
          %229 = vsyncadd [#allocation6], %s228
          %s231 = sshll.u32 [#allocation5], 4
          %s232 = int_to_ptr.vmem [resolvable:$true] %s231
          %234 = dma.hbm_to_vmem [thread:$0]  %s1, 16, %s232, [#allocation6]
        $region16: #{resblock_pallas.4} parent=11 // pred_fallthru
          _
        // Predicated region
        $region17: #{resblock_pallas.4} parent=11 // pred_check
          %p235 = pneg %p94
        $region18: #{resblock_pallas.4} parent=11 // pred_check_branch
          %237 = sbr.rel (%p235) target = $region20
        $region19: #{resblock_pallas.4} parent=11 // pred_region
          %s239 = ssub.s32 16, 16
          %240 = vsyncadd [#allocation6], %s239
          %s242 = sshll.u32 [#allocation7], 4
          %s243 = int_to_ptr.vmem [resolvable:$true] %s242
          %245 = dma.hbm_to_vmem [thread:$0]  %s2, 16, %s243, [#allocation6]
        $region20: #{resblock_pallas.4} parent=11 // pred_fallthru
          _
        // Predicated region
        $region21: #{resblock_pallas.4} parent=11 // pred_check
          %p246 = pneg %p115
        $region22: #{resblock_pallas.4} parent=11 // pred_check_branch
          %248 = sbr.rel (%p246) target = $region24
        $region23: #{resblock_pallas.4} parent=11 // pred_region
          %s250 = ssub.s32 6144, 6144
          %251 = vsyncadd [#allocation9], %s250
          %s252 = sshll.u32 [#allocation8], 4
          %s253 = int_to_ptr.vmem [resolvable:$true] %s252
          %258 = dma.hbm_to_vmem [thread:$0]  %s3, 6144, %s253, [#allocation9], 128, 128, 8
        $region24: #{resblock_pallas.4} parent=11 // pred_fallthru
          _
        // Predicated region
        $region25: #{resblock_pallas.4} parent=11 // pred_check
          %p259 = pneg %p136
        $region26: #{resblock_pallas.4} parent=11 // pred_check_branch
          %261 = sbr.rel (%p259) target = $region28
        $region27: #{resblock_pallas.4} parent=11 // pred_region
          %s263 = ssub.s32 16, 16
          %264 = vsyncadd [#allocation9], %s263
          %s266 = sshll.u32 [#allocation10], 4
          %s267 = int_to_ptr.vmem [resolvable:$true] %s266
          %269 = dma.hbm_to_vmem [thread:$0]  %s4, 16, %s267, [#allocation9]
        $region28: #{resblock_pallas.4} parent=11 // pred_fallthru
          _
        // Predicated region
        $region29: #{resblock_pallas.4} parent=11 // pred_check
          %p270 = pneg %p157
        $region30: #{resblock_pallas.4} parent=11 // pred_check_branch
          %272 = sbr.rel (%p270) target = $region32
        $region31: #{resblock_pallas.4} parent=11 // pred_region
          %s274 = ssub.s32 2048, 2048
          %275 = vsyncadd [#allocation12], %s274
          %s276 = sshll.u32 [#allocation11], 4
          %s277 = int_to_ptr.vmem [resolvable:$true] %s276
          %282 = dma.hbm_to_vmem [thread:$0]  %s5, 2048, %s277, [#allocation12], 128, 128, 8
        $region32: #{resblock_pallas.4} parent=11 // pred_fallthru
          _
      $region12: #{resblock_pallas.4} parent=5 // pred_fallthru
        _
      %p283 = scmp.lt.s32.totalorder %s26, 2
      // Predicated region
      $region33: #{resblock_pallas.4} parent=5 // pred_check
        %p284 = pneg %p283
      $region34: #{resblock_pallas.4} parent=5 // pred_check_branch
        %286 = sbr.rel (%p284) target = $region36
      $region35: #{resblock_pallas.4} parent=5 // pred_region
        // Predicated region
        $region37: #{resblock_pallas.4} parent=35 // pred_check
          %p287 = pneg %p46
        $region38: #{resblock_pallas.4} parent=35 // pred_check_branch
          %289 = sbr.rel (%p287) target = $region40
        $region39: #{resblock_pallas.4} parent=35 // pred_region
          %s290 = sand.u32 %s36, 1
          %s291 = scalar_lea.sflag [#allocation3], %s290
          %s292 = sand.u32 %s36, 1
          %s293 = smul.addr %s292, 8
          %s294 = scalar_lea.vmem [#allocation2], %s293
          %s296 = ssub.s32 128, 128
          %297 = vsyncadd %s291, %s296
          %s298 = smul.addr %s26, 128
          %s299 = scalar_lea.hbm %s0, %s298
          %s301 = sshll.u32 %s294, 4
          %s302 = int_to_ptr.vmem [resolvable:$true] %s301
          %304 = dma.hbm_to_vmem [thread:$0]  %s299, 128, %s302, %s291
        $region40: #{resblock_pallas.4} parent=35 // pred_fallthru
          _
      $region36: #{resblock_pallas.4} parent=5 // pred_fallthru
        _
      %p305 = scmp.le.s32.totalorder 1, %s26
      %p306 = scmp.lt.s32.totalorder %s26, 3
      %p307 = pnand %p305, %p306
      %p308 = pneg %p307
      // Predicated region
      $region41: #{resblock_pallas.4} parent=5 // pred_check
        _
      $region42: #{resblock_pallas.4} parent=5 // pred_check_branch
        %310 = sbr.rel (%p307) target = $region44
      $region43: #{resblock_pallas.4} parent=5 // pred_region
        %s311 = ssub.s32 %s26, 1
        %s312 = sand.u32 %s39, 1
        %s313 = scalar_lea.sflag [#allocation3], %s312
        %s314 = sand.u32 %s39, 1
        %s315 = smul.addr %s314, 8
        %s316 = scalar_lea.vmem [#allocation2], %s315
        // Predicated region
        $region45: #{resblock_pallas.4} parent=43 // pred_check
          %p317 = pneg %p52
        $region46: #{resblock_pallas.4} parent=43 // pred_check_branch
          %319 = sbr.rel (%p317) target = $region48
        $region47: #{resblock_pallas.4} parent=43 // pred_region
          %320 = dma.done %s313, 128
        $region48: #{resblock_pallas.4} parent=43 // pred_fallthru
          _
        // Predicated region
        $region49: #{resblock_pallas.4} parent=43 // pred_check
          %p321 = pneg %p73
        $region50: #{resblock_pallas.4} parent=43 // pred_check_branch
          %323 = sbr.rel (%p321) target = $region52
        $region51: #{resblock_pallas.4} parent=43 // pred_region
          %324 = dma.done [#allocation6], 16
        $region52: #{resblock_pallas.4} parent=43 // pred_fallthru
          _
        // Predicated region
        $region53: #{resblock_pallas.4} parent=43 // pred_check
          %p325 = pneg %p94
        $region54: #{resblock_pallas.4} parent=43 // pred_check_branch
          %327 = sbr.rel (%p325) target = $region56
        $region55: #{resblock_pallas.4} parent=43 // pred_region
          %328 = dma.done [#allocation6], 16
        $region56: #{resblock_pallas.4} parent=43 // pred_fallthru
          _
        // Predicated region
        $region57: #{resblock_pallas.4} parent=43 // pred_check
          %p329 = pneg %p115
        $region58: #{resblock_pallas.4} parent=43 // pred_check_branch
          %331 = sbr.rel (%p329) target = $region60
        $region59: #{resblock_pallas.4} parent=43 // pred_region
          %332 = dma.done [#allocation9], 6144
        $region60: #{resblock_pallas.4} parent=43 // pred_fallthru
          _
        // Predicated region
        $region61: #{resblock_pallas.4} parent=43 // pred_check
          %p333 = pneg %p136
        $region62: #{resblock_pallas.4} parent=43 // pred_check_branch
          %335 = sbr.rel (%p333) target = $region64
        $region63: #{resblock_pallas.4} parent=43 // pred_region
          %336 = dma.done [#allocation9], 16
        $region64: #{resblock_pallas.4} parent=43 // pred_fallthru
          _
        // Predicated region
        $region65: #{resblock_pallas.4} parent=43 // pred_check
          %p337 = pneg %p157
        $region66: #{resblock_pallas.4} parent=43 // pred_check_branch
          %339 = sbr.rel (%p337) target = $region68
        $region67: #{resblock_pallas.4} parent=43 // pred_region
          %340 = dma.done [#allocation12], 2048
        $region68: #{resblock_pallas.4} parent=43 // pred_fallthru
          _
        %s341 = sand.u32 %s39, 1
        %s342 = scalar_lea.sflag [#allocation3], %s341
        %s343 = sand.u32 %s39, 1
        %s344 = smul.addr %s343, 8
        %s345 = scalar_lea.vmem [#allocation2], %s344
        %p346 = pneg %p52
        %p347 = pneg %p49
        %p348 = pneg %p73
        %p349 = pneg %p70
        %p350 = pneg %p94
        %p351 = pneg %p91
        %p352 = pneg %p115
        %p353 = pneg %p112
        %p354 = pneg %p136
        %p355 = pneg %p133
        %p356 = pneg %p157
        %p357 = pneg %p154
        %p358 = pneg %p183
        %p359 = pneg %p180
        %s360 = sand.u32 %s170, 1
        %s361 = scalar_lea.sflag [#allocation4], %s360
        %s362 = sand.u32 %s170, 1
        %s363 = smul.addr %s362, 8
        %s364 = scalar_lea.vmem [#allocation13], %s363
        %p365 = pneg %p209
        %p366 = pneg %p206
        %s367 = sand.u32 %s196, 1
        %s368 = scalar_lea.sflag [#allocation15], %s367
        %s369 = sand.u32 %s196, 1
        %s370 = smul.addr %s369, 2
        %s371 = scalar_lea.vmem [#allocation14], %s370
        %v372 = vld [vmem:[%s316] sm:$0xff]
        %v373 = vld [vmem:[#allocation5] sm:$0x1]
        %v375 = vlaneseq
        %v376 = vshrl.u32 %v375, 7
        %v377 = vsub.s32 0, %v376
        %v378 = vrot.slane %v373, %v377
        %v380 = vmul.f32 %v372, %v378
        %v381 = vld [vmem:[#allocation7] sm:$0x1]
        %v383 = vlaneseq
        %v384 = vshrl.u32 %v383, 7
        %v385 = vsub.s32 0, %v384
        %v386 = vrot.slane %v381, %v385
        %v388 = vadd.f32 %v380, %v386
        %v389 = vmax.f32 %v388, 0.0
        %v391 = vrot.slane %v389, 7
        %vm393 = vcmask 1040384
        %v394 = vsel %vm393, 0.0, %v391
        %v395 = vrot.slane %v389, 1
        %vm397 = vcmask 1046528
        %v398 = vsel %vm397, %v395, 0.0
        %v399 = vlaneseq
        %v400 = vshrl.u32 %v399, 7
        %vm401 = vcmp.lt.s32.totalorder %v400, 0
        %v402 = vsub.s32 0, %v400
        %v403 = vsel %vm401, %v402, %v400
        %v404 = vshrl.u32 %v403, 3
        %v405 = vand.u32 %v403, 7
        %v406 = vsub.s32 0, %v405
        %v407 = vsel %vm401, %v406, %v405
        %vm408 = vcmp.ne.s32.totalorder %v407, 0
        %vm409 = vcmp.lt.s32.totalorder %v407, 0
        %vm410 = vmand %vm409, %vm408
        %v411 = vadd.s32 %v407, 8
        %v412 = vsel %vm410, %v411, %v407
        %vm413 = vcmp.eq.s32.totalorder %v412, 0
        %v414 = vsel %vm413, 1, 0
        %vm415 = vcmp.eq.s32.totalorder %v414, 1
        %v416 = vsel %vm415, 0.0, %v394
        %vm417 = vcmp.eq.s32.totalorder %v412, 7
        %v418 = vsel %vm417, 1, 0
        %vm419 = vcmp.eq.s32.totalorder %v418, 1
        %v420 = vsel %vm419, 0.0, %v398
        %v421 = vld [vmem:[#allocation8] sm:$0xff]
        %v422 = vld [vmem:[#allocation8 + $0x8] sm:$0xff]
        %v423 = vld [vmem:[#allocation8 + $0x10] sm:$0xff]
        %v424 = vld [vmem:[#allocation8 + $0x18] sm:$0xff]
        %v425 = vld [vmem:[#allocation8 + $0x20] sm:$0xff]
        %v426 = vld [vmem:[#allocation8 + $0x28] sm:$0xff]
        %v427 = vld [vmem:[#allocation8 + $0x30] sm:$0xff]
        %v428 = vld [vmem:[#allocation8 + $0x38] sm:$0xff]
        %v429 = vld [vmem:[#allocation8 + $0x40] sm:$0xff]
        %v430 = vld [vmem:[#allocation8 + $0x48] sm:$0xff]
        %v431 = vld [vmem:[#allocation8 + $0x50] sm:$0xff]
        %v432 = vld [vmem:[#allocation8 + $0x58] sm:$0xff]
        %v433 = vld [vmem:[#allocation8 + $0x60] sm:$0xff]
        %v434 = vld [vmem:[#allocation8 + $0x68] sm:$0xff]
        %v435 = vld [vmem:[#allocation8 + $0x70] sm:$0xff]
        %v436 = vld [vmem:[#allocation8 + $0x78] sm:$0xff]
        %v437 = vld [vmem:[#allocation8 + $0x80] sm:$0xff]
        %v438 = vld [vmem:[#allocation8 + $0x88] sm:$0xff]
        %v439 = vld [vmem:[#allocation8 + $0x90] sm:$0xff]
        %v440 = vld [vmem:[#allocation8 + $0x98] sm:$0xff]
        %v441 = vld [vmem:[#allocation8 + $0xa0] sm:$0xff]
        %v442 = vld [vmem:[#allocation8 + $0xa8] sm:$0xff]
        %v443 = vld [vmem:[#allocation8 + $0xb0] sm:$0xff]
        %v444 = vld [vmem:[#allocation8 + $0xb8] sm:$0xff]
        %v445 = vld [vmem:[#allocation8 + $0xc0] sm:$0xff]
        %v446 = vld [vmem:[#allocation8 + $0xc8] sm:$0xff]
        %v447 = vld [vmem:[#allocation8 + $0xd0] sm:$0xff]
        %v448 = vld [vmem:[#allocation8 + $0xd8] sm:$0xff]
        %v449 = vld [vmem:[#allocation8 + $0xe0] sm:$0xff]
        %v450 = vld [vmem:[#allocation8 + $0xe8] sm:$0xff]
        %v451 = vld [vmem:[#allocation8 + $0xf0] sm:$0xff]
        %v452 = vld [vmem:[#allocation8 + $0xf8] sm:$0xff]
        %v453 = vld [vmem:[#allocation8 + $0x100] sm:$0xff]
        %v454 = vld [vmem:[#allocation8 + $0x108] sm:$0xff]
        %v455 = vld [vmem:[#allocation8 + $0x110] sm:$0xff]
        %v456 = vld [vmem:[#allocation8 + $0x118] sm:$0xff]
        %v457 = vld [vmem:[#allocation8 + $0x120] sm:$0xff]
        %v458 = vld [vmem:[#allocation8 + $0x128] sm:$0xff]
        %v459 = vld [vmem:[#allocation8 + $0x130] sm:$0xff]
        %v460 = vld [vmem:[#allocation8 + $0x138] sm:$0xff]
        %v461 = vld [vmem:[#allocation8 + $0x140] sm:$0xff]
        %v462 = vld [vmem:[#allocation8 + $0x148] sm:$0xff]
        %v463 = vld [vmem:[#allocation8 + $0x150] sm:$0xff]
        %v464 = vld [vmem:[#allocation8 + $0x158] sm:$0xff]
        %v465 = vld [vmem:[#allocation8 + $0x160] sm:$0xff]
        %v466 = vld [vmem:[#allocation8 + $0x168] sm:$0xff]
        %v467 = vld [vmem:[#allocation8 + $0x170] sm:$0xff]
        %v468 = vld [vmem:[#allocation8 + $0x178] sm:$0xff]
        %v469 = vld [vmem:[#allocation10] sm:$0x1]
        %v471 = vlaneseq
        %v472 = vshrl.u32 %v471, 7
        %v473 = vsub.s32 0, %v472
        %v474 = vrot.slane %v469, %v473
        %476 = vmatprep.subr.mxu0 0.0
        %477 = vmatpush1.msra.mxu0 %v421
        %478 = vmatprep.subr.mxu0 0.0
        %479 = vmatpush1.msra.mxu0 %v422
        %480 = vmatprep.subr.mxu0 0.0
        %481 = vmatpush1.msra.mxu0 %v423
        %482 = vmatprep.subr.mxu0 0.0
        %483 = vmatpush1.msra.mxu0 %v424
        %484 = vmatprep.subr.mxu0 0.0
        %485 = vmatpush1.msra.mxu0 %v425
        %486 = vmatprep.subr.mxu0 0.0
        %487 = vmatpush1.msra.mxu0 %v426
        %488 = vmatprep.subr.mxu0 0.0
        %489 = vmatpush1.msra.mxu0 %v427
        %490 = vmatprep.subr.mxu0 0.0
        %491 = vmatpush1.msra.mxu0 %v428
        %492 = vmatprep.subr.mxu0 0.0
        %493 = vmatpush1.msra.mxu0 %v429
        %494 = vmatprep.subr.mxu0 0.0
        %495 = vmatpush1.msra.mxu0 %v430
        %496 = vmatprep.subr.mxu0 0.0
        %497 = vmatpush1.msra.mxu0 %v431
        %498 = vmatprep.subr.mxu0 0.0
        %499 = vmatpush1.msra.mxu0 %v432
        %500 = vmatprep.subr.mxu0 0.0
        %501 = vmatpush1.msra.mxu0 %v433
        %502 = vmatprep.subr.mxu0 0.0
        %503 = vmatpush1.msra.mxu0 %v434
        %504 = vmatprep.subr.mxu0 0.0
        %505 = vmatpush1.msra.mxu0 %v435
        %506 = vmatprep.subr.mxu0 0.0
        %507 = vmatpush1.msra.mxu0 %v436
        %508 = vmatprep.subr.mxu0 0.0
        %509 = vmatpush1.msra.mxu0 %v437
        %510 = vmatprep.subr.mxu0 0.0
        %511 = vmatpush1.msra.mxu0 %v438
        %512 = vmatprep.subr.mxu0 0.0
        %513 = vmatpush1.msra.mxu0 %v439
        %514 = vmatprep.subr.mxu0 0.0
        %515 = vmatpush1.msra.mxu0 %v440
        %516 = vmatprep.subr.mxu0 0.0
        %517 = vmatpush1.msra.mxu0 %v441
        %518 = vmatprep.subr.mxu0 0.0
        %519 = vmatpush1.msra.mxu0 %v442
        %520 = vmatprep.subr.mxu0 0.0
        %521 = vmatpush1.msra.mxu0 %v443
        %522 = vmatprep.subr.mxu0 0.0
        %523 = vmatpush1.msra.mxu0 %v444
        %524 = vmatprep.subr.mxu0 0.0
        %525 = vmatpush1.msra.mxu0 %v445
        %526 = vmatprep.subr.mxu0 0.0
        %527 = vmatpush1.msra.mxu0 %v446
        %528 = vmatprep.subr.mxu0 0.0
        %529 = vmatpush1.msra.mxu0 %v447
        %530 = vmatprep.subr.mxu0 0.0
        %531 = vmatpush1.msra.mxu0 %v448
        %532 = vmatprep.subr.mxu0 0.0
        %533 = vmatpush1.msra.mxu0 %v449
        %534 = vmatprep.subr.mxu0 0.0
        %535 = vmatpush1.msra.mxu0 %v450
        %536 = vmatprep.subr.mxu0 0.0
        %537 = vmatpush1.msra.mxu0 %v451
        %538 = vmatprep.subr.mxu0 0.0
        %539 = vmatpush1.msra.mxu0 %v452
        %540 = vmatprep.mubr.f32.mxu0 %v389
        %541 = vmatmul.mubr.f32.gmra.mrb[0].mxu0 %v416
        %v542 = vpop.f32.mrb[0].mxu0
        %v543 = vadd.f32 %v474, %v542
        %v544 = vpop.f32.mrb[0].mxu0
        %545 = vdwg.mxu0
        %546 = vmatprep.subr.mxu0 0.0
        %547 = vmatpush1.msra.mxu0 %v453
        %548 = vmatprep.subr.mxu0 0.0
        %549 = vmatpush1.msra.mxu0 %v454
        %550 = vmatprep.subr.mxu0 0.0
        %551 = vmatpush1.msra.mxu0 %v455
        %552 = vmatprep.subr.mxu0 0.0
        %553 = vmatpush1.msra.mxu0 %v456
        %554 = vmatprep.subr.mxu0 0.0
        %555 = vmatpush1.msra.mxu0 %v457
        %556 = vmatprep.subr.mxu0 0.0
        %557 = vmatpush1.msra.mxu0 %v458
        %558 = vmatprep.subr.mxu0 0.0
        %559 = vmatpush1.msra.mxu0 %v459
        %560 = vmatprep.subr.mxu0 0.0
        %561 = vmatpush1.msra.mxu0 %v460
        %562 = vmatprep.subr.mxu0 0.0
        %563 = vmatpush1.msra.mxu0 %v461
        %564 = vmatprep.subr.mxu0 0.0
        %565 = vmatpush1.msra.mxu0 %v462
        %566 = vmatprep.subr.mxu0 0.0
        %567 = vmatpush1.msra.mxu0 %v463
        %568 = vmatprep.subr.mxu0 0.0
        %569 = vmatpush1.msra.mxu0 %v464
        %570 = vmatprep.subr.mxu0 0.0
        %571 = vmatpush1.msra.mxu0 %v465
        %572 = vmatprep.subr.mxu0 0.0
        %573 = vmatpush1.msra.mxu0 %v466
        %574 = vmatprep.subr.mxu0 0.0
        %575 = vmatpush1.msra.mxu0 %v467
        %576 = vmatprep.subr.mxu0 0.0
        %577 = vmatpush1.msra.mxu0 %v468
        %578 = vmatprep.subr.mxu0 0.0
        %579 = vmatpush1.msra.mxu0 0.0
        %580 = vmatprep.subr.mxu0 0.0
        %581 = vmatpush1.msra.mxu0 0.0
        %582 = vmatprep.subr.mxu0 0.0
        %583 = vmatpush1.msra.mxu0 0.0
        %584 = vmatprep.subr.mxu0 0.0
        %585 = vmatpush1.msra.mxu0 0.0
        %586 = vmatprep.subr.mxu0 0.0
        %587 = vmatpush1.msra.mxu0 0.0
        %588 = vmatprep.subr.mxu0 0.0
        %589 = vmatpush1.msra.mxu0 0.0
        %590 = vmatprep.subr.mxu0 0.0
        %591 = vmatpush1.msra.mxu0 0.0
        %592 = vmatprep.subr.mxu0 0.0
        %593 = vmatpush1.msra.mxu0 0.0
        %594 = vmatprep.subr.mxu0 0.0
        %595 = vmatpush1.msra.mxu0 0.0
        %596 = vmatprep.subr.mxu0 0.0
        %597 = vmatpush1.msra.mxu0 0.0
        %598 = vmatprep.subr.mxu0 0.0
        %599 = vmatpush1.msra.mxu0 0.0
        %600 = vmatprep.subr.mxu0 0.0
        %601 = vmatpush1.msra.mxu0 0.0
        %602 = vmatprep.subr.mxu0 0.0
        %603 = vmatpush1.msra.mxu0 0.0
        %604 = vmatprep.subr.mxu0 0.0
        %605 = vmatpush1.msra.mxu0 0.0
        %606 = vmatprep.subr.mxu0 0.0
        %607 = vmatpush1.msra.mxu0 0.0
        %608 = vmatprep.subr.mxu0 0.0
        %609 = vmatpush1.msra.mxu0 0.0
        %610 = vmatprep.mubr.f32.mxu0 0.0
        %611 = vmatmul.mubr.f32.gmra.mrb[0].mxu0 %v420
        %v612 = vpop.f32.mrb[0].mxu0
        %v613 = vadd.f32 %v543, %v612
        %v614 = vpop.f32.mrb[0].mxu0
        %615 = vdwg.mxu0
        %616 = vst [vmem:[%s364] sm:$0xff] %v613
        %v617 = vrot.slane %v613, 4
        %v618 = vadd.f32 %v613, %v617
        %v619 = vrot.slane %v618, 2
        %v620 = vadd.f32 %v618, %v619
        %v621 = vrot.slane %v620, 1
        %v622 = vadd.f32 %v620, %v621
        %v623 = vmul.f32 %v613, %v613
        %v624 = vrot.slane %v623, 4
        %v625 = vadd.f32 %v623, %v624
        %v626 = vrot.slane %v625, 2
        %v627 = vadd.f32 %v625, %v626
        %v628 = vrot.slane %v627, 1
        %v629 = vadd.f32 %v627, %v628
        %v630 = vsel %vm393, %v622, %v629
        %v631 = vld [vmem:[#allocation11] sm:$0xff]
        %v632 = vld [vmem:[#allocation11 + $0x8] sm:$0xff]
        %v633 = vld [vmem:[#allocation11 + $0x10] sm:$0xff]
        %v634 = vld [vmem:[#allocation11 + $0x18] sm:$0xff]
        %v635 = vld [vmem:[#allocation11 + $0x20] sm:$0xff]
        %v636 = vld [vmem:[#allocation11 + $0x28] sm:$0xff]
        %v637 = vld [vmem:[#allocation11 + $0x30] sm:$0xff]
        %v638 = vld [vmem:[#allocation11 + $0x38] sm:$0xff]
        %v639 = vld [vmem:[#allocation11 + $0x40] sm:$0xff]
        %v640 = vld [vmem:[#allocation11 + $0x48] sm:$0xff]
        %v641 = vld [vmem:[#allocation11 + $0x50] sm:$0xff]
        %v642 = vld [vmem:[#allocation11 + $0x58] sm:$0xff]
        %v643 = vld [vmem:[#allocation11 + $0x60] sm:$0xff]
        %v644 = vld [vmem:[#allocation11 + $0x68] sm:$0xff]
        %v645 = vld [vmem:[#allocation11 + $0x70] sm:$0xff]
        %v646 = vld [vmem:[#allocation11 + $0x78] sm:$0xff]
        %647 = vmatprep.subr.mxu0 0.0
        %648 = vmatpush1.msra.mxu0 %v631
        %649 = vmatprep.subr.mxu0 0.0
        %650 = vmatpush1.msra.mxu0 %v632
        %651 = vmatprep.subr.mxu0 0.0
        %652 = vmatpush1.msra.mxu0 %v633
        %653 = vmatprep.subr.mxu0 0.0
        %654 = vmatpush1.msra.mxu0 %v634
        %655 = vmatprep.subr.mxu0 0.0
        %656 = vmatpush1.msra.mxu0 %v635
        %657 = vmatprep.subr.mxu0 0.0
        %658 = vmatpush1.msra.mxu0 %v636
        %659 = vmatprep.subr.mxu0 0.0
        %660 = vmatpush1.msra.mxu0 %v637
        %661 = vmatprep.subr.mxu0 0.0
        %662 = vmatpush1.msra.mxu0 %v638
        %663 = vmatprep.subr.mxu0 0.0
        %664 = vmatpush1.msra.mxu0 %v639
        %665 = vmatprep.subr.mxu0 0.0
        %666 = vmatpush1.msra.mxu0 %v640
        %667 = vmatprep.subr.mxu0 0.0
        %668 = vmatpush1.msra.mxu0 %v641
        %669 = vmatprep.subr.mxu0 0.0
        %670 = vmatpush1.msra.mxu0 %v642
        %671 = vmatprep.subr.mxu0 0.0
        %672 = vmatpush1.msra.mxu0 %v643
        %673 = vmatprep.subr.mxu0 0.0
        %674 = vmatpush1.msra.mxu0 %v644
        %675 = vmatprep.subr.mxu0 0.0
        %676 = vmatpush1.msra.mxu0 %v645
        %677 = vmatprep.subr.mxu0 0.0
        %678 = vmatpush1.msra.mxu0 %v646
        %679 = vmatprep.subr.mxu0 0.0
        %680 = vmatpush1.msra.mxu0 0.0
        %681 = vmatprep.subr.mxu0 0.0
        %682 = vmatpush1.msra.mxu0 0.0
        %683 = vmatprep.subr.mxu0 0.0
        %684 = vmatpush1.msra.mxu0 0.0
        %685 = vmatprep.subr.mxu0 0.0
        %686 = vmatpush1.msra.mxu0 0.0
        %687 = vmatprep.subr.mxu0 0.0
        %688 = vmatpush1.msra.mxu0 0.0
        %689 = vmatprep.subr.mxu0 0.0
        %690 = vmatpush1.msra.mxu0 0.0
        %691 = vmatprep.subr.mxu0 0.0
        %692 = vmatpush1.msra.mxu0 0.0
        %693 = vmatprep.subr.mxu0 0.0
        %694 = vmatpush1.msra.mxu0 0.0
        %695 = vmatprep.subr.mxu0 0.0
        %696 = vmatpush1.msra.mxu0 0.0
        %697 = vmatprep.subr.mxu0 0.0
        %698 = vmatpush1.msra.mxu0 0.0
        %699 = vmatprep.subr.mxu0 0.0
        %700 = vmatpush1.msra.mxu0 0.0
        %701 = vmatprep.subr.mxu0 0.0
        %702 = vmatpush1.msra.mxu0 0.0
        %703 = vmatprep.subr.mxu0 0.0
        %704 = vmatpush1.msra.mxu0 0.0
        %705 = vmatprep.subr.mxu0 0.0
        %706 = vmatpush1.msra.mxu0 0.0
        %707 = vmatprep.subr.mxu0 0.0
        %708 = vmatpush1.msra.mxu0 0.0
        %709 = vmatprep.subr.mxu0 0.0
        %710 = vmatpush1.msra.mxu0 0.0
        %711 = vmatprep.mubr.f32.mxu0 0.0
        %712 = vmatmul.mubr.f32.gmra.mrb[0].mxu0 %v630
        %v713 = vpop.f32.mrb[0].mxu0
        %v714 = vadd.f32 0.0, %v713
        %v715 = vpop.f32.mrb[0].mxu0
        %716 = vdwg.mxu0
        %vm717 = vcmask 25600
        %718 = vst.msk [vmem:[%s371] sm:$0x3] %vm717, %v714
        %s719 = sand.u32 %s170, 1
        %s720 = scalar_lea.sflag [#allocation4], %s719
        %s721 = sand.u32 %s170, 1
        %s722 = smul.addr %s721, 8
        %s723 = scalar_lea.vmem [#allocation13], %s722
        %s724 = sand.u32 %s196, 1
        %s725 = scalar_lea.sflag [#allocation15], %s724
        %s726 = sand.u32 %s196, 1
        %s727 = smul.addr %s726, 2
        %s728 = scalar_lea.vmem [#allocation14], %s727
        // Predicated region
        $region69: #{resblock_pallas.4} parent=43 // pred_check
          %p729 = pneg %p180
        $region70: #{resblock_pallas.4} parent=43 // pred_check_branch
          %731 = sbr.rel (%p729) target = $region72
        $region71: #{resblock_pallas.4} parent=43 // pred_region
          %s733 = ssub.s32 128, 128
          %734 = vsyncadd %s720, %s733
          %s735 = smul.addr %s31, 128
          %s736 = scalar_lea.hbm %s6, %s735
          %s738 = sshll.u32 %s723, 4
          %s739 = int_to_ptr.vmem [resolvable:$true] %s738
          %741 = dma.vmem_to_hbm [thread:$0]  %s739, 128, %s736, %s720
        $region72: #{resblock_pallas.4} parent=43 // pred_fallthru
          _
        // Predicated region
        $region73: #{resblock_pallas.4} parent=43 // pred_check
          %p742 = pneg %p206
        $region74: #{resblock_pallas.4} parent=43 // pred_check_branch
          %744 = sbr.rel (%p742) target = $region76
        $region75: #{resblock_pallas.4} parent=43 // pred_region
          %s746 = ssub.s32 32, 32
          %747 = vsyncadd %s725, %s746
          %s748 = smul.addr %s31, 32
          %s749 = scalar_lea.hbm %s7, %s748
          %s751 = sshll.u32 %s728, 4
          %s752 = int_to_ptr.vmem [resolvable:$true] %s751
          %754 = dma.vmem_to_hbm [thread:$0]  %s752, 32, %s749, %s725
        $region76: #{resblock_pallas.4} parent=43 // pred_fallthru
          _
      $region44: #{resblock_pallas.4} parent=5 // pred_fallthru
        _
      %p755 = scmp.le.s32.totalorder 2, %s26
      // Predicated region
      $region77: #{resblock_pallas.4} parent=5 // pred_check
        %p756 = pneg %p755
      $region78: #{resblock_pallas.4} parent=5 // pred_check_branch
        %758 = sbr.rel (%p756) target = $region80
      $region79: #{resblock_pallas.4} parent=5 // pred_region
        %s759 = ssub.s32 %s26, 2
        // Predicated region
        $region81: #{resblock_pallas.4} parent=79 // pred_check
          %p760 = pneg %p186
        $region82: #{resblock_pallas.4} parent=79 // pred_check_branch
          %762 = sbr.rel (%p760) target = $region84
        $region83: #{resblock_pallas.4} parent=79 // pred_region
          %s763 = sand.u32 %s171, 1
          %s764 = scalar_lea.sflag [#allocation4], %s763
          %s765 = sand.u32 %s171, 1
          %s766 = smul.addr %s765, 8
          %s767 = scalar_lea.vmem [#allocation13], %s766
          %768 = dma.done %s764, 128
        $region84: #{resblock_pallas.4} parent=79 // pred_fallthru
          _
        // Predicated region
        $region85: #{resblock_pallas.4} parent=79 // pred_check
          %p769 = pneg %p212
        $region86: #{resblock_pallas.4} parent=79 // pred_check_branch
          %771 = sbr.rel (%p769) target = $region88
        $region87: #{resblock_pallas.4} parent=79 // pred_region
          %s772 = sand.u32 %s197, 1
          %s773 = scalar_lea.sflag [#allocation15], %s772
          %s774 = sand.u32 %s197, 1
          %s775 = smul.addr %s774, 2
          %s776 = scalar_lea.vmem [#allocation14], %s775
          %777 = dma.done %s773, 32
        $region88: #{resblock_pallas.4} parent=79 // pred_fallthru
          _
      $region80: #{resblock_pallas.4} parent=5 // pred_fallthru
        _
    $region6: #{resblock_pallas.4} parent=1 // loop_footer
      %s30 = sadd.s32 1, %s26
    $region7: #{resblock_pallas.4} parent=1 // loop_footer_branch
      %25 = sbr.rel target = $region3
    $region8: #{resblock_pallas.4} parent=1 // loop_exit
      _
    %778 = vsyncpa [#allocation3], 1
    %s779 = scalar_lea.sflag [#allocation3], 1
    %780 = vsyncpa %s779, 1
    %781 = vsyncpa [#allocation6], 1
    %782 = vsyncpa [#allocation9], 1
    %783 = vsyncpa [#allocation12], 1
    %784 = vsyncpa [#allocation4], 1
    %s785 = scalar_lea.sflag [#allocation4], 1
    %786 = vsyncpa %s785, 1
    %787 = vsyncpa [#allocation15], 1
    %s788 = scalar_lea.sflag [#allocation15], 1
    %789 = vsyncpa %s788, 1

</llo_original>
